<compile_context>
chip_gen: v7x
topology: tpu7x:2x2x1
jax: 0.10.0
libtpu: 0.0.40
codegen_flags: <defaults>
</compile_context>

<pallas_src>
import jax
import jax.numpy as jnp
from jax.experimental import pallas as pl
from jax.experimental.pallas import tpu as pltpu


# Keep the scoped-VMEM request <= ~48 MiB: safe on v7x (64 MiB VMEM per
# TensorCore) and well within v5e/v6e's 128 MiB physical VMEM.
_VMEM_LIMIT_BYTES = 48 * 1024 * 1024


# ----------------------------- Pallas kernels -------------------------------
def _matmul_kernel(x_ref, w_ref, o_ref):
    # Full-K block: single MXU matmul per (M, tn) output tile, no accumulator.
    o_ref[...] = jnp.dot(x_ref[...], w_ref[...],
                         preferred_element_type=jnp.float32)


def _conv0_stack_kernel(x_ref, *refs):
    # refs = (w0, scale0, shift0, ..., w4, scale4, shift4, o_ref)
    o_ref = refs[-1]
    n_layers = (len(refs) - 1) // 3
    h = x_ref[...]
    for i in range(n_layers):
        w = refs[3 * i][...]
        scale = refs[3 * i + 1][...]
        shift = refs[3 * i + 2][...]
        h = jnp.dot(h, w, preferred_element_type=jnp.float32)
        h = jnp.maximum(h * scale + shift, 0.0)          # folded BN + ReLU
    o_ref[...] = h.astype(o_ref.dtype)


# ------------------------------ kernel wrappers ------------------------------
def _pad_rows(x):
    M = x.shape[0]
    Mp = ((M + 7) // 8) * 8
    if Mp != M:
        x = jnp.pad(x, ((0, Mp - M), (0, 0)))
    return x, M, Mp


def weight_streaming_matmul(x, w, *, tn_cap=512):
    """x @ w for tiny-M (<=56 rows) weight-streaming matmuls.

    No K reduction axis in the grid (full-K blocks), grid only over N so the
    weight-column blocks shard across TensorCores on v7x.
    """
    x, M, Mp = _pad_rows(x)
    K, N = w.shape
    assert x.shape[1] == K
    tn = min(N, tn_cap)
    while N % tn:                                          # largest divisor <= cap
        tn -= 128
    out = pl.pallas_call(
        _matmul_kernel,
        out_shape=jax.ShapeDtypeStruct((Mp, N), jnp.float32),
        grid_spec=pltpu.PrefetchScalarGridSpec(
            num_scalar_prefetch=0,
            grid=(N // tn,),
            in_specs=[
                pl.BlockSpec((Mp, K), lambda j: (0, 0)),   # X: resident, full K
                pl.BlockSpec((K, tn), lambda j: (0, j)),   # W: streamed by column block
            ],
            out_specs=pl.BlockSpec((Mp, tn), lambda j: (0, j)),
        ),
        compiler_params=pltpu.CompilerParams(
            dimension_semantics=("parallel",),
            vmem_limit_bytes=_VMEM_LIMIT_BYTES),
    )(x, w)
    return out[:M]


def conv0_stack(x_nhwc, layer_params, eps=1e-5):
    """Fused 5x [1x1 conv (no bias) -> BN(eval) -> ReLU] in one pallas_call."""
    B, H, W, Cin = x_nhwc.shape
    x, M, Mp = _pad_rows(x_nhwc.reshape(B * H * W, Cin))
    ops = []
    for (w, gamma, beta, mean, var) in layer_params:
        cout, cin = w.shape[0], w.shape[1]
        wm = jnp.transpose(w.reshape(cout, cin))            # (Cin, Cout)
        scale = gamma / jnp.sqrt(var + eps)
        shift = beta - mean * scale
        ops += [wm.astype(jnp.float32),
                scale.reshape(1, cout).astype(jnp.float32),
                shift.reshape(1, cout).astype(jnp.float32)]
    cout_final = layer_params[-1][0].shape[0]
    # No grid: every weight (~5.4 MB total) + the tiny activation fit in VMEM.
    y = pl.pallas_call(
        _conv0_stack_kernel,
        out_shape=jax.ShapeDtypeStruct((Mp, cout_final), jnp.float32),
        compiler_params=pltpu.CompilerParams(
            vmem_limit_bytes=_VMEM_LIMIT_BYTES),
    )(x, *ops)
    return y[:M].reshape(B, H, W, cout_final)


# ------------------------------ layer glue ----------------------------------
def deconv2x2(x, w, b):
    """nn.ConvTranspose2d(Cin, Cout, 2) on NHWC x. w: (Cin, Cout, 2, 2), b: (Cout,)."""
    B, H, W, Cin = x.shape
    Cout = w.shape[1]
    wm = jnp.transpose(w, (0, 2, 3, 1)).reshape(Cin, 4 * Cout)   # (Cin, 4*Cout)
    y = weight_streaming_matmul(x.reshape(B * H * W, Cin), wm)
    y = y.reshape(B, H, W, 2, 2, Cout)
    out = jnp.zeros((B, H + 1, W + 1, Cout), jnp.float32)
    for ki in range(2):
        for kj in range(2):
            out = out.at[:, ki:ki + H, kj:kj + W, :].add(y[:, :, :, ki, kj, :])
    return out + b


def feats_fusion_forward(feats_nchw, p):
    f0, f1, f2, f3 = [jnp.transpose(f, (0, 2, 3, 1)) for f in feats_nchw]
    x3 = deconv2x2(f3, p["w3"], p["b3"])
    x2 = deconv2x2(x3 + f2, p["w2"], p["b2"])
    x1 = deconv2x2(x2 + f1, p["w1"], p["b1"])
    h = x1 + f0
    h = conv0_stack(h, p["conv0"])
    return jnp.transpose(h, (0, 3, 1, 2))                         # back to NCHW


# --------------------------- deterministic params ---------------------------
def init_params(key):
    keys = iter(jax.random.split(key, 32))
    p = {}
    # ConvTranspose2d weights are (Cin, Cout, kH, kW) in PyTorch layout.
    for name, cin, cout in [("3", 2048, 1024), ("2", 1024, 512), ("1", 512, 256)]:
        p[f"w{name}"] = jax.random.normal(next(keys), (cin, cout, 2, 2),
                                          jnp.float32) / jnp.sqrt(4.0 * cin)
        p[f"b{name}"] = 0.01 * jax.random.normal(next(keys), (cout,), jnp.float32)
    # conv0: ConvModule(1x1 conv no-bias, BN, ReLU) x5
    p["conv0"] = []
    for cin, cout in [(256, 512), (512, 1024), (1024, 512), (512, 256), (256, 128)]:
        w = jax.random.normal(next(keys), (cout, cin, 1, 1), jnp.float32) / jnp.sqrt(float(cin))
        gamma = 1.0 + 0.1 * jax.random.normal(next(keys), (cout,), jnp.float32)
        beta = 0.1 * jax.random.normal(next(keys), (cout,), jnp.float32)
        mean = 0.1 * jax.random.normal(next(keys), (cout,), jnp.float32)
        var = jnp.abs(1.0 + 0.1 * jax.random.normal(next(keys), (cout,), jnp.float32))
        p["conv0"].append((w, gamma, beta, mean, var))
    return p


# ----------------------------- pure-JAX reference ---------------------------
def reference_forward(feats_nchw, p):
    hp = jax.lax.Precision.HIGHEST

    def deconv_ref(x, w, b):
        B, H, W, _ = x.shape
        Cout = w.shape[1]
        out = jnp.zeros((B, H + 1, W + 1, Cout), jnp.float32) + b
        for ki in range(2):
            for kj in range(2):
                y = jnp.einsum("bhwc,cd->bhwd", x, w[:, :, ki, kj], precision=hp)
                out = out.at[:, ki:ki + H, kj:kj + W, :].add(y)
        return out

    def cbr_ref(x, w, gamma, beta, mean, var, eps=1e-5):
        y = jnp.einsum("bhwc,dc->bhwd", x, w[:, :, 0, 0], precision=hp)
        y = (y - mean) / jnp.sqrt(var + eps) * gamma + beta
        return jnp.maximum(y, 0.0)

    f0, f1, f2, f3 = [jnp.transpose(f, (0, 2, 3, 1)) for f in feats_nchw]
    x3 = deconv_ref(f3, p["w3"], p["b3"])
    x2 = deconv_ref(x3 + f2, p["w2"], p["b2"])
    x1 = deconv_ref(x2 + f1, p["w1"], p["b1"])
    h = x1 + f0
    for (w, gamma, beta, mean, var) in p["conv0"]:
        h = cbr_ref(h, w, gamma, beta, mean, var)
    return jnp.transpose(h, (0, 3, 1, 2))


# --------------------------------- main --------------------------------------
if __name__ == "__main__":
    key = jax.random.PRNGKey(0)
    kp, k0, k1, k2, k3 = jax.random.split(key, 5)
    B, H, W = 1, 4, 4
    # FPN-style pyramid: channels are fixed by the module, spatial kept small.
    feat3 = jax.random.normal(k3, (B, 2048, H, W), jnp.float32)
    feat2 = jax.random.normal(k2, (B, 1024, H + 1, W + 1), jnp.float32)
    feat1 = jax.random.normal(k1, (B, 512, H + 2, W + 2), jnp.float32)
    feat0 = jax.random.normal(k0, (B, 256, H + 3, W + 3), jnp.float32)
    params = init_params(kp)

    feats = (feat0, feat1, feat2, feat3)
    out = jax.block_until_ready(feats_fusion_forward(feats, params))
    assert out.shape == (B, 128, H + 3, W + 3), out.shape

    ref = jax.block_until_ready(reference_forward(feats, params))
    max_err = float(jnp.max(jnp.abs(out - ref)))
    assert jnp.allclose(out, ref, rtol=1e-2, atol=1e-2), max_err

    print("KERNEL_OK")
</pallas_src>

<mosaic_0001>
module attributes {stable_mosaic.version = 11 : i64} {
  func.func @_matmul_kernel(%arg0: i32, %arg1: memref<16x2048xf32, #tpu.memory_space<vmem>>, %arg2: memref<2048x512xf32, #tpu.memory_space<vmem>>, %arg3: memref<16x512xf32, #tpu.memory_space<vmem>>) attributes {dimension_semantics = [#tpu.dimension_semantics<parallel>], iteration_bounds = array<i64: 8>, scalar_prefetch = 0 : i64, scratch_operands = 0 : i64, tpu.core_type = #tpu.core_type<tc>, window_params = [{pipeline_mode = #tpu.pipeline_mode<synchronous>, transform_indices = @transform_0, window_bounds = array<i64: 16, 2048>}, {transform_indices = @transform_1, window_bounds = array<i64: 2048, 512>}, {transform_indices = @transform_2, window_bounds = array<i64: 16, 512>}]} {
    %c0 = arith.constant 0 : index
    %c0_0 = arith.constant 0 : index
    %0 = vector.load %arg1[%c0, %c0_0] : memref<16x2048xf32, #tpu.memory_space<vmem>>, vector<16x2048xf32>
    %c0_1 = arith.constant 0 : index
    %c0_2 = arith.constant 0 : index
    %1 = vector.load %arg2[%c0_1, %c0_2] : memref<2048x512xf32, #tpu.memory_space<vmem>>, vector<2048x512xf32>
    %cst = arith.constant dense<0.000000e+00> : vector<16x512xf32>
    %2 = tpu.matmul %0, %1, %cst {dimension_numbers = #tpu.dot_dimension_numbers<[1], [0], [0], [1], [0, 0, 1, 1], [], []>} : vector<16x2048xf32>, vector<2048x512xf32>, vector<16x512xf32> -> vector<16x512xf32>
    %c0_3 = arith.constant 0 : index
    %c0_4 = arith.constant 0 : index
    %3 = vector.load %arg3[%c0_3, %c0_4] : memref<16x512xf32, #tpu.memory_space<vmem>>, vector<16x512xf32>
    tpu.vector_store %arg3[%c0_3, %c0_4], %2 {strides = array<i32>} : memref<16x512xf32, #tpu.memory_space<vmem>>, vector<16x512xf32>,
    return
  }
  func.func @transform_0(%arg0: i32) -> (i32, i32) {
    %c0_i32 = arith.constant 0 : i32
    %c0_i32_0 = arith.constant 0 : i32
    %c0_i32_1 = arith.constant 0 : i32
    return %c0_i32, %c0_i32_0 : i32, i32
  }
  func.func @transform_1(%arg0: i32) -> (i32, i32) {
    %c0_i32 = arith.constant 0 : i32
    %c0_i32_0 = arith.constant 0 : i32
    return %c0_i32, %arg0 : i32, i32
  }
  func.func @transform_2(%arg0: i32) -> (i32, i32) {
    %c0_i32 = arith.constant 0 : i32
    %c0_i32_0 = arith.constant 0 : i32
    return %c0_i32, %arg0 : i32, i32
  }
}

</mosaic_0001>

<llo_original>
// kernel: tpu_custom_call.1
$region0: #{tpu_custom_call.1}
  #allocation0 [shape = 'u32[]', space=smem, size = 0x4, offset = 0x4, fixed_abs, tag = 'smem constant byte address 0x4 - core index']
  #allocation1 [shape = 'u32[144,128]{1,0:T(1,128)}', space=vmem, size = 0x12000, scoped, tag = 'internal scratch']
  %s0 = inlined_call_operand.hbm [shape: f32[16,2048], index: 0, kind: input, shape index: {}]
  %s1 = inlined_call_operand.hbm [shape: f32[2048,4096], index: 1, kind: input, shape index: {}]
  %s2 = inlined_call_operand.hbm [shape: f32[16,4096], index: 2, kind: output, shape index: {}]
  %s3 = sld [smem:[#allocation0]]
  $region49: #{tpu_custom_call.1} parent=0
    _
  %s5 = ssub.s32 1, %s3
  %s6 = scalar_select 0, %s5, %s3
  $region1: #{tpu_custom_call.1} parent=0
    #allocation2 [shape = 'u8[131072]{0}', space=vmem, size = 0x20000, scoped, tag = 'input window, operand 0, single buffered']
    #allocation3 [shape = 's32[2]{0}', space=sflag, size = 0x8, scoped, tag = 'scoped memory for tpu_custom_call.1']
    #allocation4 [shape = 's32[2]{0}', space=sflag, size = 0x8, scoped, tag = 'scoped memory for tpu_custom_call.1']
    #allocation5 [shape = 'u8[8388608]{0}', space=vmem, size = 0x800000, scoped, tag = 'input window, operand 1']
    #allocation6 [shape = 's32[2]{0}', space=sflag, size = 0x8, scoped, tag = 'scoped memory for tpu_custom_call.1']
    #allocation7 [shape = 'u8[65536]{0}', space=vmem, size = 0x10000, scoped, tag = 'output window, operand 0']
    %7 = vsyncpa [#allocation3], 0
    %8 = vsyncpa [#allocation6], 0
    %s9 = scalar_lea.sflag [#allocation6], 1
    %10 = vsyncpa %s9, 0
    %11 = vsyncpa [#allocation4], 0
    %s12 = scalar_lea.sflag [#allocation4], 1
    %13 = vsyncpa %s12, 0
    loop: start=0, step=1, limit=10
    $region2: #{tpu_custom_call.1} parent=1 // loop_pre_header
      _
    $region3: #{tpu_custom_call.1} parent=1 // loop_header
      %s15 = sphi 0, %s19
      %p16 = scmp.ge.s32.totalorder %s15, 10
      %s23 = sphi 0, %s23
      %s25 = sphi 0, %s23
      %s26 = sphi 0, %s25
      %s40 = sphi 0, %s26
      %s46 = sphi 0, %s48
      %s49 = sphi 0, %s46
      %s50 = sphi 0, %s49
      %s66 = sphi 0, %s50
      %s72 = sphi 0, %s74
      %s75 = sphi 0, %s72
      %s76 = sphi 0, %s75
      %s92 = sphi 0, %s76
    $region4: #{tpu_custom_call.1} parent=1 // loop_header_branch
      %18 = sbr.rel (%p16) target = $region8
    $region5: #{tpu_custom_call.1} parent=1 // loop_body
      %s20 = ssub.s32 %s15, 1
      %s21 = ssub.s32 %s15, 2
      %s22 = sadd.s32 %s15, 1
      %s24 = sadd.s32 %s23, 1
      %p27 = scmp.eq.s32.totalorder %s15, 7
      %p28 = scmp.ne.s32.totalorder %s23, %s25
      %p29 = scmp.eq.s32.totalorder %s15, 0
      %p30 = por %p28, %p29
      %p31 = scmp.ne.s32.totalorder %s23, %s25
      %p32 = scmp.eq.s32.totalorder %s20, 7
      %p33 = por %p31, %p32
      %p34 = scmp.ne.s32.totalorder %s25, %s26
      %p35 = scmp.eq.s32.totalorder %s20, 0
      %p36 = por %p34, %p35
      %p37 = scmp.ne.s32.totalorder %s25, %s26
      %p38 = scmp.eq.s32.totalorder %s21, 7
      %p39 = por %p37, %p38
      %p41 = scmp.ne.s32.totalorder %s26, %s40
      %p42 = scmp.eq.s32.totalorder %s21, 0
      %p43 = por %p41, %p42
      %s44 = ssub.s32 %s15, %s22
      %p45 = scmp.eq.s32.totalorder %s44, 0
      %s47 = sadd.s32 %s46, 1
      %s48 = scalar_select %p45, %s46, %s47
      %p51 = pneg %p45
      %p52 = scmp.eq.s32.totalorder %s15, 7
      %p53 = por %p51, %p52
      %p54 = scmp.ne.s32.totalorder %s46, %s49
      %p55 = scmp.eq.s32.totalorder %s15, 0
      %p56 = por %p54, %p55
      %p57 = scmp.ne.s32.totalorder %s46, %s49
      %p58 = scmp.eq.s32.totalorder %s20, 7
      %p59 = por %p57, %p58
      %p60 = scmp.ne.s32.totalorder %s49, %s50
      %p61 = scmp.eq.s32.totalorder %s20, 0
      %p62 = por %p60, %p61
      %p63 = scmp.ne.s32.totalorder %s49, %s50
      %p64 = scmp.eq.s32.totalorder %s21, 7
      %p65 = por %p63, %p64
      %p67 = scmp.ne.s32.totalorder %s50, %s66
      %p68 = scmp.eq.s32.totalorder %s21, 0
      %p69 = por %p67, %p68
      %s70 = ssub.s32 %s15, %s22
      %p71 = scmp.eq.s32.totalorder %s70, 0
      %s73 = sadd.s32 %s72, 1
      %s74 = scalar_select %p71, %s72, %s73
      %p77 = pneg %p71
      %p78 = scmp.eq.s32.totalorder %s15, 7
      %p79 = por %p77, %p78
      %p80 = scmp.ne.s32.totalorder %s72, %s75
      %p81 = scmp.eq.s32.totalorder %s15, 0
      %p82 = por %p80, %p81
      %p83 = scmp.ne.s32.totalorder %s72, %s75
      %p84 = scmp.eq.s32.totalorder %s20, 7
      %p85 = por %p83, %p84
      %p86 = scmp.ne.s32.totalorder %s75, %s76
      %p87 = scmp.eq.s32.totalorder %s20, 0
      %p88 = por %p86, %p87
      %p89 = scmp.ne.s32.totalorder %s75, %s76
      %p90 = scmp.eq.s32.totalorder %s21, 7
      %p91 = por %p89, %p90
      %p93 = scmp.ne.s32.totalorder %s76, %s92
      %p94 = scmp.eq.s32.totalorder %s21, 0
      %p95 = por %p93, %p94
      %p96 = scmp.le.s32.totalorder 1, %s15
      %p97 = scmp.lt.s32.totalorder %s15, 9
      %p98 = pnand %p96, %p97
      %p99 = pneg %p98
      // Predicated region
      $region9: #{tpu_custom_call.1} parent=5 // pred_check
        _
      $region10: #{tpu_custom_call.1} parent=5 // pred_check_branch
        %101 = sbr.rel (%p98) target = $region12
      $region11: #{tpu_custom_call.1} parent=5 // pred_region
        %s102 = ssub.s32 %s15, 1
        // Predicated region
        $region13: #{tpu_custom_call.1} parent=11 // pred_check
          %p103 = pneg %p36
        $region14: #{tpu_custom_call.1} parent=11 // pred_check_branch
          %105 = sbr.rel (%p103) target = $region16
        $region15: #{tpu_custom_call.1} parent=11 // pred_region
          %s107 = ssub.s32 4096, 4096
          %108 = vsyncadd [#allocation3], %s107
          %s109 = sshll.u32 [#allocation2], 4
          %s110 = int_to_ptr.vmem [resolvable:$true] %s109
          %115 = dma.hbm_to_vmem [thread:$0]  %s0, 4096, %s110, [#allocation3], 2048, 2048, 128
        $region16: #{tpu_custom_call.1} parent=11 // pred_fallthru
          _
      $region12: #{tpu_custom_call.1} parent=5 // pred_fallthru
        _
      %p116 = scmp.lt.s32.totalorder %s15, 8
      // Predicated region
      $region17: #{tpu_custom_call.1} parent=5 // pred_check
        %p117 = pneg %p116
      $region18: #{tpu_custom_call.1} parent=5 // pred_check_branch
        %119 = sbr.rel (%p117) target = $region20
      $region19: #{tpu_custom_call.1} parent=5 // pred_region
        // Predicated region
        $region21: #{tpu_custom_call.1} parent=19 // pred_check
          %p120 = pneg %p56
        $region22: #{tpu_custom_call.1} parent=19 // pred_check_branch
          %122 = sbr.rel (%p120) target = $region24
        $region23: #{tpu_custom_call.1} parent=19 // pred_region
          %s123 = sand.u32 %s46, 1
          %s124 = scalar_lea.sflag [#allocation6], %s123
          %s125 = sand.u32 %s46, 1
          %s126 = smul.addr %s125, 8192
          %s127 = scalar_lea.vmem [#allocation5], %s126
          %s128 = smul.u32 4, %s15
          %s130 = ssub.s32 131072, 131072
          %131 = vsyncadd %s124, %s130
          %s132 = smul.addr %s128, 128
          %s133 = scalar_lea.hbm %s1, %s132
          %s134 = sshll.u32 %s127, 4
          %s135 = int_to_ptr.vmem [resolvable:$true] %s134
          %140 = dma.hbm_to_vmem [thread:$0]  %s133, 131072, %s135, %s124, 4096, 512, 32
        $region24: #{tpu_custom_call.1} parent=19 // pred_fallthru
          _
      $region20: #{tpu_custom_call.1} parent=5 // pred_fallthru
        _
      %p141 = scmp.le.s32.totalorder 1, %s15
      %p142 = scmp.lt.s32.totalorder %s15, 9
      %p143 = pnand %p141, %p142
      %p144 = pneg %p143
      // Predicated region
      $region25: #{tpu_custom_call.1} parent=5 // pred_check
        _
      $region26: #{tpu_custom_call.1} parent=5 // pred_check_branch
        %146 = sbr.rel (%p143) target = $region28
      $region27: #{tpu_custom_call.1} parent=5 // pred_region
        %s147 = ssub.s32 %s15, 1
        // Predicated region
        $region29: #{tpu_custom_call.1} parent=27 // pred_check
          %p148 = pneg %p36
        $region30: #{tpu_custom_call.1} parent=27 // pred_check_branch
          %150 = sbr.rel (%p148) target = $region32
        $region31: #{tpu_custom_call.1} parent=27 // pred_region
          %151 = dma.done [#allocation3], 4096
        $region32: #{tpu_custom_call.1} parent=27 // pred_fallthru
          _
        %s152 = sand.u32 %s49, 1
        %s153 = scalar_lea.sflag [#allocation6], %s152
        %s154 = sand.u32 %s49, 1
        %s155 = smul.addr %s154, 8192
        %s156 = scalar_lea.vmem [#allocation5], %s155
        // Predicated region
        $region33: #{tpu_custom_call.1} parent=27 // pred_check
          %p157 = pneg %p62
        $region34: #{tpu_custom_call.1} parent=27 // pred_check_branch
          %159 = sbr.rel (%p157) target = $region36
        $region35: #{tpu_custom_call.1} parent=27 // pred_region
          %160 = dma.done %s153, 131072
        $region36: #{tpu_custom_call.1} parent=27 // pred_fallthru
          _
        %p161 = pneg %p36
        %p162 = pneg %p33
        %s163 = sand.u32 %s49, 1
        %s164 = scalar_lea.sflag [#allocation6], %s163
        %s165 = sand.u32 %s49, 1
        %s166 = smul.addr %s165, 8192
        %s167 = scalar_lea.vmem [#allocation5], %s166
        %p168 = pneg %p62
        %p169 = pneg %p59
        %p170 = pneg %p88
        %p171 = pneg %p85
        %s172 = sand.u32 %s75, 1
        %s173 = scalar_lea.sflag [#allocation4], %s172
        %s174 = sand.u32 %s75, 1
        %s175 = smul.addr %s174, 64
        %s176 = scalar_lea.vmem [#allocation7], %s175
        %s177 = smul.u32 4, %s20
        %s178 = smul.u32 4, %s20
        %v179 = vld [vmem:[#allocation2] sm:$0xff]
        %v180 = vld [vmem:[#allocation2 + $0x8] sm:$0xff]
        %v181 = vld [vmem:[#allocation2 + $0x10] sm:$0xff]
        %v182 = vld [vmem:[#allocation2 + $0x18] sm:$0xff]
        %v183 = vld [vmem:[#allocation2 + $0x20] sm:$0xff]
        %v184 = vld [vmem:[#allocation2 + $0x28] sm:$0xff]
        %v185 = vld [vmem:[#allocation2 + $0x30] sm:$0xff]
        %v186 = vld [vmem:[#allocation2 + $0x38] sm:$0xff]
        %v187 = vld [vmem:[#allocation2 + $0x40] sm:$0xff]
        %v188 = vld [vmem:[#allocation2 + $0x48] sm:$0xff]
        %v189 = vld [vmem:[#allocation2 + $0x50] sm:$0xff]
        %v190 = vld [vmem:[#allocation2 + $0x58] sm:$0xff]
        %v191 = vld [vmem:[#allocation2 + $0x60] sm:$0xff]
        %v192 = vld [vmem:[#allocation2 + $0x68] sm:$0xff]
        %v193 = vld [vmem:[#allocation2 + $0x70] sm:$0xff]
        %v194 = vld [vmem:[#allocation2 + $0x78] sm:$0xff]
        %v195 = vld [vmem:[#allocation2 + $0x80] sm:$0xff]
        %v196 = vld [vmem:[#allocation2 + $0x88] sm:$0xff]
        %v197 = vld [vmem:[#allocation2 + $0x90] sm:$0xff]
        %v198 = vld [vmem:[#allocation2 + $0x98] sm:$0xff]
        %v199 = vld [vmem:[#allocation2 + $0xa0] sm:$0xff]
        %v200 = vld [vmem:[#allocation2 + $0xa8] sm:$0xff]
        %v201 = vld [vmem:[#allocation2 + $0xb0] sm:$0xff]
        %v202 = vld [vmem:[#allocation2 + $0xb8] sm:$0xff]
        %v203 = vld [vmem:[#allocation2 + $0xc0] sm:$0xff]
        %v204 = vld [vmem:[#allocation2 + $0xc8] sm:$0xff]
        %v205 = vld [vmem:[#allocation2 + $0xd0] sm:$0xff]
        %v206 = vld [vmem:[#allocation2 + $0xd8] sm:$0xff]
        %v207 = vld [vmem:[#allocation2 + $0xe0] sm:$0xff]
        %v208 = vld [vmem:[#allocation2 + $0xe8] sm:$0xff]
        %v209 = vld [vmem:[#allocation2 + $0xf0] sm:$0xff]
        %v210 = vld [vmem:[#allocation2 + $0xf8] sm:$0xff]
        %v211 = vld [vmem:[%s156] sm:$0xff]
        %v212 = vld [vmem:[%s156 + $0x8] sm:$0xff]
        %v213 = vld [vmem:[%s156 + $0x10] sm:$0xff]
        %v214 = vld [vmem:[%s156 + $0x18] sm:$0xff]
        %v215 = vld [vmem:[%s156 + $0x20] sm:$0xff]
        %v216 = vld [vmem:[%s156 + $0x28] sm:$0xff]
        %v217 = vld [vmem:[%s156 + $0x30] sm:$0xff]
        %v218 = vld [vmem:[%s156 + $0x38] sm:$0xff]
        %v219 = vld [vmem:[%s156 + $0x40] sm:$0xff]
        %v220 = vld [vmem:[%s156 + $0x48] sm:$0xff]
        %v221 = vld [vmem:[%s156 + $0x50] sm:$0xff]
        %v222 = vld [vmem:[%s156 + $0x58] sm:$0xff]
        %v223 = vld [vmem:[%s156 + $0x60] sm:$0xff]
        %v224 = vld [vmem:[%s156 + $0x68] sm:$0xff]
        %v225 = vld [vmem:[%s156 + $0x70] sm:$0xff]
        %v226 = vld [vmem:[%s156 + $0x78] sm:$0xff]
        %v227 = vld [vmem:[%s156 + $0x80] sm:$0xff]
        %v228 = vld [vmem:[%s156 + $0x88] sm:$0xff]
        %v229 = vld [vmem:[%s156 + $0x90] sm:$0xff]
        %v230 = vld [vmem:[%s156 + $0x98] sm:$0xff]
        %v231 = vld [vmem:[%s156 + $0xa0] sm:$0xff]
        %v232 = vld [vmem:[%s156 + $0xa8] sm:$0xff]
        %v233 = vld [vmem:[%s156 + $0xb0] sm:$0xff]
        %v234 = vld [vmem:[%s156 + $0xb8] sm:$0xff]
        %v235 = vld [vmem:[%s156 + $0xc0] sm:$0xff]
        %v236 = vld [vmem:[%s156 + $0xc8] sm:$0xff]
        %v237 = vld [vmem:[%s156 + $0xd0] sm:$0xff]
        %v238 = vld [vmem:[%s156 + $0xd8] sm:$0xff]
        %v239 = vld [vmem:[%s156 + $0xe0] sm:$0xff]
        %v240 = vld [vmem:[%s156 + $0xe8] sm:$0xff]
        %v241 = vld [vmem:[%s156 + $0xf0] sm:$0xff]
        %v242 = vld [vmem:[%s156 + $0xf8] sm:$0xff]
        %v243 = vld [vmem:[%s156 + $0x100] sm:$0xff]
        %v244 = vld [vmem:[%s156 + $0x108] sm:$0xff]
        %v245 = vld [vmem:[%s156 + $0x110] sm:$0xff]
        %v246 = vld [vmem:[%s156 + $0x118] sm:$0xff]
        %v247 = vld [vmem:[%s156 + $0x120] sm:$0xff]
        %v248 = vld [vmem:[%s156 + $0x128] sm:$0xff]
        %v249 = vld [vmem:[%s156 + $0x130] sm:$0xff]
        %v250 = vld [vmem:[%s156 + $0x138] sm:$0xff]
        %v251 = vld [vmem:[%s156 + $0x140] sm:$0xff]
        %v252 = vld [vmem:[%s156 + $0x148] sm:$0xff]
        %v253 = vld [vmem:[%s156 + $0x150] sm:$0xff]
        %v254 = vld [vmem:[%s156 + $0x158] sm:$0xff]
        %v255 = vld [vmem:[%s156 + $0x160] sm:$0xff]
        %v256 = vld [vmem:[%s156 + $0x168] sm:$0xff]
        %v257 = vld [vmem:[%s156 + $0x170] sm:$0xff]
        %v258 = vld [vmem:[%s156 + $0x178] sm:$0xff]
        %v259 = vld [vmem:[%s156 + $0x180] sm:$0xff]
        %v260 = vld [vmem:[%s156 + $0x188] sm:$0xff]
        %v261 = vld [vmem:[%s156 + $0x190] sm:$0xff]
        %v262 = vld [vmem:[%s156 + $0x198] sm:$0xff]
        %v263 = vld [vmem:[%s156 + $0x1a0] sm:$0xff]
        %v264 = vld [vmem:[%s156 + $0x1a8] sm:$0xff]
        %v265 = vld [vmem:[%s156 + $0x1b0] sm:$0xff]
        %v266 = vld [vmem:[%s156 + $0x1b8] sm:$0xff]
        %v267 = vld [vmem:[%s156 + $0x1c0] sm:$0xff]
        %v268 = vld [vmem:[%s156 + $0x1c8] sm:$0xff]
        %v269 = vld [vmem:[%s156 + $0x1d0] sm:$0xff]
        %v270 = vld [vmem:[%s156 + $0x1d8] sm:$0xff]
        %v271 = vld [vmem:[%s156 + $0x1e0] sm:$0xff]
        %v272 = vld [vmem:[%s156 + $0x1e8] sm:$0xff]
        %v273 = vld [vmem:[%s156 + $0x1f0] sm:$0xff]
        %v274 = vld [vmem:[%s156 + $0x1f8] sm:$0xff]
        %v275 = vld [vmem:[%s156 + $0x200] sm:$0xff]
        %v276 = vld [vmem:[%s156 + $0x208] sm:$0xff]
        %v277 = vld [vmem:[%s156 + $0x210] sm:$0xff]
        %v278 = vld [vmem:[%s156 + $0x218] sm:$0xff]
        %v279 = vld [vmem:[%s156 + $0x220] sm:$0xff]
        %v280 = vld [vmem:[%s156 + $0x228] sm:$0xff]
        %v281 = vld [vmem:[%s156 + $0x230] sm:$0xff]
        %v282 = vld [vmem:[%s156 + $0x238] sm:$0xff]
        %v283 = vld [vmem:[%s156 + $0x240] sm:$0xff]
        %v284 = vld [vmem:[%s156 + $0x248] sm:$0xff]
        %v285 = vld [vmem:[%s156 + $0x250] sm:$0xff]
        %v286 = vld [vmem:[%s156 + $0x258] sm:$0xff]
        %v287 = vld [vmem:[%s156 + $0x260] sm:$0xff]
        %v288 = vld [vmem:[%s156 + $0x268] sm:$0xff]
        %v289 = vld [vmem:[%s156 + $0x270] sm:$0xff]
        %v290 = vld [vmem:[%s156 + $0x278] sm:$0xff]
        %v291 = vld [vmem:[%s156 + $0x280] sm:$0xff]
        %v292 = vld [vmem:[%s156 + $0x288] sm:$0xff]
        %v293 = vld [vmem:[%s156 + $0x290] sm:$0xff]
        %v294 = vld [vmem:[%s156 + $0x298] sm:$0xff]
        %v295 = vld [vmem:[%s156 + $0x2a0] sm:$0xff]
        %v296 = vld [vmem:[%s156 + $0x2a8] sm:$0xff]
        %v297 = vld [vmem:[%s156 + $0x2b0] sm:$0xff]
        %v298 = vld [vmem:[%s156 + $0x2b8] sm:$0xff]
        %v299 = vld [vmem:[%s156 + $0x2c0] sm:$0xff]
        %v300 = vld [vmem:[%s156 + $0x2c8] sm:$0xff]
        %v301 = vld [vmem:[%s156 + $0x2d0] sm:$0xff]
        %v302 = vld [vmem:[%s156 + $0x2d8] sm:$0xff]
        %v303 = vld [vmem:[%s156 + $0x2e0] sm:$0xff]
        %v304 = vld [vmem:[%s156 + $0x2e8] sm:$0xff]
        %v305 = vld [vmem:[%s156 + $0x2f0] sm:$0xff]
        %v306 = vld [vmem:[%s156 + $0x2f8] sm:$0xff]
        %v307 = vld [vmem:[%s156 + $0x300] sm:$0xff]
        %v308 = vld [vmem:[%s156 + $0x308] sm:$0xff]
        %v309 = vld [vmem:[%s156 + $0x310] sm:$0xff]
        %v310 = vld [vmem:[%s156 + $0x318] sm:$0xff]
        %v311 = vld [vmem:[%s156 + $0x320] sm:$0xff]
        %v312 = vld [vmem:[%s156 + $0x328] sm:$0xff]
        %v313 = vld [vmem:[%s156 + $0x330] sm:$0xff]
        %v314 = vld [vmem:[%s156 + $0x338] sm:$0xff]
        %v315 = vld [vmem:[%s156 + $0x340] sm:$0xff]
        %v316 = vld [vmem:[%s156 + $0x348] sm:$0xff]
        %v317 = vld [vmem:[%s156 + $0x350] sm:$0xff]
        %v318 = vld [vmem:[%s156 + $0x358] sm:$0xff]
        %v319 = vld [vmem:[%s156 + $0x360] sm:$0xff]
        %v320 = vld [vmem:[%s156 + $0x368] sm:$0xff]
        %v321 = vld [vmem:[%s156 + $0x370] sm:$0xff]
        %v322 = vld [vmem:[%s156 + $0x378] sm:$0xff]
        %v323 = vld [vmem:[%s156 + $0x380] sm:$0xff]
        %v324 = vld [vmem:[%s156 + $0x388] sm:$0xff]
        %v325 = vld [vmem:[%s156 + $0x390] sm:$0xff]
        %v326 = vld [vmem:[%s156 + $0x398] sm:$0xff]
        %v327 = vld [vmem:[%s156 + $0x3a0] sm:$0xff]
        %v328 = vld [vmem:[%s156 + $0x3a8] sm:$0xff]
        %v329 = vld [vmem:[%s156 + $0x3b0] sm:$0xff]
        %v330 = vld [vmem:[%s156 + $0x3b8] sm:$0xff]
        %v331 = vld [vmem:[%s156 + $0x3c0] sm:$0xff]
        %v332 = vld [vmem:[%s156 + $0x3c8] sm:$0xff]
        %v333 = vld [vmem:[%s156 + $0x3d0] sm:$0xff]
        %v334 = vld [vmem:[%s156 + $0x3d8] sm:$0xff]
        %v335 = vld [vmem:[%s156 + $0x3e0] sm:$0xff]
        %v336 = vld [vmem:[%s156 + $0x3e8] sm:$0xff]
        %v337 = vld [vmem:[%s156 + $0x3f0] sm:$0xff]
        %v338 = vld [vmem:[%s156 + $0x3f8] sm:$0xff]
        %v339 = vld [vmem:[%s156 + $0x400] sm:$0xff]
        %v340 = vld [vmem:[%s156 + $0x408] sm:$0xff]
        %v341 = vld [vmem:[%s156 + $0x410] sm:$0xff]
        %v342 = vld [vmem:[%s156 + $0x418] sm:$0xff]
        %v343 = vld [vmem:[%s156 + $0x420] sm:$0xff]
        %v344 = vld [vmem:[%s156 + $0x428] sm:$0xff]
        %v345 = vld [vmem:[%s156 + $0x430] sm:$0xff]
        %v346 = vld [vmem:[%s156 + $0x438] sm:$0xff]
        %v347 = vld [vmem:[%s156 + $0x440] sm:$0xff]
        %v348 = vld [vmem:[%s156 + $0x448] sm:$0xff]
        %v349 = vld [vmem:[%s156 + $0x450] sm:$0xff]
        %v350 = vld [vmem:[%s156 + $0x458] sm:$0xff]
        %v351 = vld [vmem:[%s156 + $0x460] sm:$0xff]
        %v352 = vld [vmem:[%s156 + $0x468] sm:$0xff]
        %v353 = vld [vmem:[%s156 + $0x470] sm:$0xff]
        %v354 = vld [vmem:[%s156 + $0x478] sm:$0xff]
        %v355 = vld [vmem:[%s156 + $0x480] sm:$0xff]
        %v356 = vld [vmem:[%s156 + $0x488] sm:$0xff]
        %v357 = vld [vmem:[%s156 + $0x490] sm:$0xff]
        %v358 = vld [vmem:[%s156 + $0x498] sm:$0xff]
        %v359 = vld [vmem:[%s156 + $0x4a0] sm:$0xff]
        %v360 = vld [vmem:[%s156 + $0x4a8] sm:$0xff]
        %v361 = vld [vmem:[%s156 + $0x4b0] sm:$0xff]
        %v362 = vld [vmem:[%s156 + $0x4b8] sm:$0xff]
        %v363 = vld [vmem:[%s156 + $0x4c0] sm:$0xff]
        %v364 = vld [vmem:[%s156 + $0x4c8] sm:$0xff]
        %v365 = vld [vmem:[%s156 + $0x4d0] sm:$0xff]
        %v366 = vld [vmem:[%s156 + $0x4d8] sm:$0xff]
        %v367 = vld [vmem:[%s156 + $0x4e0] sm:$0xff]
        %v368 = vld [vmem:[%s156 + $0x4e8] sm:$0xff]
        %v369 = vld [vmem:[%s156 + $0x4f0] sm:$0xff]
        %v370 = vld [vmem:[%s156 + $0x4f8] sm:$0xff]
        %v371 = vld [vmem:[%s156 + $0x500] sm:$0xff]
        %v372 = vld [vmem:[%s156 + $0x508] sm:$0xff]
        %v373 = vld [vmem:[%s156 + $0x510] sm:$0xff]
        %v374 = vld [vmem:[%s156 + $0x518] sm:$0xff]
        %v375 = vld [vmem:[%s156 + $0x520] sm:$0xff]
        %v376 = vld [vmem:[%s156 + $0x528] sm:$0xff]
        %v377 = vld [vmem:[%s156 + $0x530] sm:$0xff]
        %v378 = vld [vmem:[%s156 + $0x538] sm:$0xff]
        %v379 = vld [vmem:[%s156 + $0x540] sm:$0xff]
        %v380 = vld [vmem:[%s156 + $0x548] sm:$0xff]
        %v381 = vld [vmem:[%s156 + $0x550] sm:$0xff]
        %v382 = vld [vmem:[%s156 + $0x558] sm:$0xff]
        %v383 = vld [vmem:[%s156 + $0x560] sm:$0xff]
        %v384 = vld [vmem:[%s156 + $0x568] sm:$0xff]
        %v385 = vld [vmem:[%s156 + $0x570] sm:$0xff]
        %v386 = vld [vmem:[%s156 + $0x578] sm:$0xff]
        %v387 = vld [vmem:[%s156 + $0x580] sm:$0xff]
        %v388 = vld [vmem:[%s156 + $0x588] sm:$0xff]
        %v389 = vld [vmem:[%s156 + $0x590] sm:$0xff]
        %v390 = vld [vmem:[%s156 + $0x598] sm:$0xff]
        %v391 = vld [vmem:[%s156 + $0x5a0] sm:$0xff]
        %v392 = vld [vmem:[%s156 + $0x5a8] sm:$0xff]
        %v393 = vld [vmem:[%s156 + $0x5b0] sm:$0xff]
        %v394 = vld [vmem:[%s156 + $0x5b8] sm:$0xff]
        %v395 = vld [vmem:[%s156 + $0x5c0] sm:$0xff]
        %v396 = vld [vmem:[%s156 + $0x5c8] sm:$0xff]
        %v397 = vld [vmem:[%s156 + $0x5d0] sm:$0xff]
        %v398 = vld [vmem:[%s156 + $0x5d8] sm:$0xff]
        %v399 = vld [vmem:[%s156 + $0x5e0] sm:$0xff]
        %v400 = vld [vmem:[%s156 + $0x5e8] sm:$0xff]
        %v401 = vld [vmem:[%s156 + $0x5f0] sm:$0xff]
        %v402 = vld [vmem:[%s156 + $0x5f8] sm:$0xff]
        %v403 = vld [vmem:[%s156 + $0x600] sm:$0xff]
        %v404 = vld [vmem:[%s156 + $0x608] sm:$0xff]
        %v405 = vld [vmem:[%s156 + $0x610] sm:$0xff]
        %v406 = vld [vmem:[%s156 + $0x618] sm:$0xff]
        %v407 = vld [vmem:[%s156 + $0x620] sm:$0xff]
        %v408 = vld [vmem:[%s156 + $0x628] sm:$0xff]
        %v409 = vld [vmem:[%s156 + $0x630] sm:$0xff]
        %v410 = vld [vmem:[%s156 + $0x638] sm:$0xff]
        %v411 = vld [vmem:[%s156 + $0x640] sm:$0xff]
        %v412 = vld [vmem:[%s156 + $0x648] sm:$0xff]
        %v413 = vld [vmem:[%s156 + $0x650] sm:$0xff]
        %v414 = vld [vmem:[%s156 + $0x658] sm:$0xff]
        %v415 = vld [vmem:[%s156 + $0x660] sm:$0xff]
        %v416 = vld [vmem:[%s156 + $0x668] sm:$0xff]
        %v417 = vld [vmem:[%s156 + $0x670] sm:$0xff]
        %v418 = vld [vmem:[%s156 + $0x678] sm:$0xff]
        %v419 = vld [vmem:[%s156 + $0x680] sm:$0xff]
        %v420 = vld [vmem:[%s156 + $0x688] sm:$0xff]
        %v421 = vld [vmem:[%s156 + $0x690] sm:$0xff]
        %v422 = vld [vmem:[%s156 + $0x698] sm:$0xff]
        %v423 = vld [vmem:[%s156 + $0x6a0] sm:$0xff]
        %v424 = vld [vmem:[%s156 + $0x6a8] sm:$0xff]
        %v425 = vld [vmem:[%s156 + $0x6b0] sm:$0xff]
        %v426 = vld [vmem:[%s156 + $0x6b8] sm:$0xff]
        %v427 = vld [vmem:[%s156 + $0x6c0] sm:$0xff]
        %v428 = vld [vmem:[%s156 + $0x6c8] sm:$0xff]
        %v429 = vld [vmem:[%s156 + $0x6d0] sm:$0xff]
        %v430 = vld [vmem:[%s156 + $0x6d8] sm:$0xff]
        %v431 = vld [vmem:[%s156 + $0x6e0] sm:$0xff]
        %v432 = vld [vmem:[%s156 + $0x6e8] sm:$0xff]
        %v433 = vld [vmem:[%s156 + $0x6f0] sm:$0xff]
        %v434 = vld [vmem:[%s156 + $0x6f8] sm:$0xff]
        %v435 = vld [vmem:[%s156 + $0x700] sm:$0xff]
        %v436 = vld [vmem:[%s156 + $0x708] sm:$0xff]
        %v437 = vld [vmem:[%s156 + $0x710] sm:$0xff]
        %v438 = vld [vmem:[%s156 + $0x718] sm:$0xff]
        %v439 = vld [vmem:[%s156 + $0x720] sm:$0xff]
        %v440 = vld [vmem:[%s156 + $0x728] sm:$0xff]
        %v441 = vld [vmem:[%s156 + $0x730] sm:$0xff]
        %v442 = vld [vmem:[%s156 + $0x738] sm:$0xff]
        %v443 = vld [vmem:[%s156 + $0x740] sm:$0xff]
        %v444 = vld [vmem:[%s156 + $0x748] sm:$0xff]
        %v445 = vld [vmem:[%s156 + $0x750] sm:$0xff]
        %v446 = vld [vmem:[%s156 + $0x758] sm:$0xff]
        %v447 = vld [vmem:[%s156 + $0x760] sm:$0xff]
        %v448 = vld [vmem:[%s156 + $0x768] sm:$0xff]
        %v449 = vld [vmem:[%s156 + $0x770] sm:$0xff]
        %v450 = vld [vmem:[%s156 + $0x778] sm:$0xff]
        %v451 = vld [vmem:[%s156 + $0x780] sm:$0xff]
        %v452 = vld [vmem:[%s156 + $0x788] sm:$0xff]
        %v453 = vld [vmem:[%s156 + $0x790] sm:$0xff]
        %v454 = vld [vmem:[%s156 + $0x798] sm:$0xff]
        %v455 = vld [vmem:[%s156 + $0x7a0] sm:$0xff]
        %v456 = vld [vmem:[%s156 + $0x7a8] sm:$0xff]
        %v457 = vld [vmem:[%s156 + $0x7b0] sm:$0xff]
        %v458 = vld [vmem:[%s156 + $0x7b8] sm:$0xff]
        %v459 = vld [vmem:[%s156 + $0x7c0] sm:$0xff]
        %v460 = vld [vmem:[%s156 + $0x7c8] sm:$0xff]
        %v461 = vld [vmem:[%s156 + $0x7d0] sm:$0xff]
        %v462 = vld [vmem:[%s156 + $0x7d8] sm:$0xff]
        %v463 = vld [vmem:[%s156 + $0x7e0] sm:$0xff]
        %v464 = vld [vmem:[%s156 + $0x7e8] sm:$0xff]
        %v465 = vld [vmem:[%s156 + $0x7f0] sm:$0xff]
        %v466 = vld [vmem:[%s156 + $0x7f8] sm:$0xff]
        %v467 = vld [vmem:[%s156 + $0x800] sm:$0xff]
        %v468 = vld [vmem:[%s156 + $0x808] sm:$0xff]
        %v469 = vld [vmem:[%s156 + $0x810] sm:$0xff]
        %v470 = vld [vmem:[%s156 + $0x818] sm:$0xff]
        %v471 = vld [vmem:[%s156 + $0x820] sm:$0xff]
        %v472 = vld [vmem:[%s156 + $0x828] sm:$0xff]
        %v473 = vld [vmem:[%s156 + $0x830] sm:$0xff]
        %v474 = vld [vmem:[%s156 + $0x838] sm:$0xff]
        %v475 = vld [vmem:[%s156 + $0x840] sm:$0xff]
        %v476 = vld [vmem:[%s156 + $0x848] sm:$0xff]
        %v477 = vld [vmem:[%s156 + $0x850] sm:$0xff]
        %v478 = vld [vmem:[%s156 + $0x858] sm:$0xff]
        %v479 = vld [vmem:[%s156 + $0x860] sm:$0xff]
        %v480 = vld [vmem:[%s156 + $0x868] sm:$0xff]
        %v481 = vld [vmem:[%s156 + $0x870] sm:$0xff]
        %v482 = vld [vmem:[%s156 + $0x878] sm:$0xff]
        %v483 = vld [vmem:[%s156 + $0x880] sm:$0xff]
        %v484 = vld [vmem:[%s156 + $0x888] sm:$0xff]
        %v485 = vld [vmem:[%s156 + $0x890] sm:$0xff]
        %v486 = vld [vmem:[%s156 + $0x898] sm:$0xff]
        %v487 = vld [vmem:[%s156 + $0x8a0] sm:$0xff]
        %v488 = vld [vmem:[%s156 + $0x8a8] sm:$0xff]
        %v489 = vld [vmem:[%s156 + $0x8b0] sm:$0xff]
        %v490 = vld [vmem:[%s156 + $0x8b8] sm:$0xff]
        %v491 = vld [vmem:[%s156 + $0x8c0] sm:$0xff]
        %v492 = vld [vmem:[%s156 + $0x8c8] sm:$0xff]
        %v493 = vld [vmem:[%s156 + $0x8d0] sm:$0xff]
        %v494 = vld [vmem:[%s156 + $0x8d8] sm:$0xff]
        %v495 = vld [vmem:[%s156 + $0x8e0] sm:$0xff]
        %v496 = vld [vmem:[%s156 + $0x8e8] sm:$0xff]
        %v497 = vld [vmem:[%s156 + $0x8f0] sm:$0xff]
        %v498 = vld [vmem:[%s156 + $0x8f8] sm:$0xff]
        %v499 = vld [vmem:[%s156 + $0x900] sm:$0xff]
        %v500 = vld [vmem:[%s156 + $0x908] sm:$0xff]
        %v501 = vld [vmem:[%s156 + $0x910] sm:$0xff]
        %v502 = vld [vmem:[%s156 + $0x918] sm:$0xff]
        %v503 = vld [vmem:[%s156 + $0x920] sm:$0xff]
        %v504 = vld [vmem:[%s156 + $0x928] sm:$0xff]
        %v505 = vld [vmem:[%s156 + $0x930] sm:$0xff]
        %v506 = vld [vmem:[%s156 + $0x938] sm:$0xff]
        %v507 = vld [vmem:[%s156 + $0x940] sm:$0xff]
        %v508 = vld [vmem:[%s156 + $0x948] sm:$0xff]
        %v509 = vld [vmem:[%s156 + $0x950] sm:$0xff]
        %v510 = vld [vmem:[%s156 + $0x958] sm:$0xff]
        %v511 = vld [vmem:[%s156 + $0x960] sm:$0xff]
        %v512 = vld [vmem:[%s156 + $0x968] sm:$0xff]
        %v513 = vld [vmem:[%s156 + $0x970] sm:$0xff]
        %v514 = vld [vmem:[%s156 + $0x978] sm:$0xff]
        %v515 = vld [vmem:[%s156 + $0x980] sm:$0xff]
        %v516 = vld [vmem:[%s156 + $0x988] sm:$0xff]
        %v517 = vld [vmem:[%s156 + $0x990] sm:$0xff]
        %v518 = vld [vmem:[%s156 + $0x998] sm:$0xff]
        %v519 = vld [vmem:[%s156 + $0x9a0] sm:$0xff]
        %v520 = vld [vmem:[%s156 + $0x9a8] sm:$0xff]
        %v521 = vld [vmem:[%s156 + $0x9b0] sm:$0xff]
        %v522 = vld [vmem:[%s156 + $0x9b8] sm:$0xff]
        %v523 = vld [vmem:[%s156 + $0x9c0] sm:$0xff]
        %v524 = vld [vmem:[%s156 + $0x9c8] sm:$0xff]
        %v525 = vld [vmem:[%s156 + $0x9d0] sm:$0xff]
        %v526 = vld [vmem:[%s156 + $0x9d8] sm:$0xff]
        %v527 = vld [vmem:[%s156 + $0x9e0] sm:$0xff]
        %v528 = vld [vmem:[%s156 + $0x9e8] sm:$0xff]
        %v529 = vld [vmem:[%s156 + $0x9f0] sm:$0xff]
        %v530 = vld [vmem:[%s156 + $0x9f8] sm:$0xff]
        %v531 = vld [vmem:[%s156 + $0xa00] sm:$0xff]
        %v532 = vld [vmem:[%s156 + $0xa08] sm:$0xff]
        %v533 = vld [vmem:[%s156 + $0xa10] sm:$0xff]
        %v534 = vld [vmem:[%s156 + $0xa18] sm:$0xff]
        %v535 = vld [vmem:[%s156 + $0xa20] sm:$0xff]
        %v536 = vld [vmem:[%s156 + $0xa28] sm:$0xff]
        %v537 = vld [vmem:[%s156 + $0xa30] sm:$0xff]
        %v538 = vld [vmem:[%s156 + $0xa38] sm:$0xff]
        %v539 = vld [vmem:[%s156 + $0xa40] sm:$0xff]
        %v540 = vld [vmem:[%s156 + $0xa48] sm:$0xff]
        %v541 = vld [vmem:[%s156 + $0xa50] sm:$0xff]
        %v542 = vld [vmem:[%s156 + $0xa58] sm:$0xff]
        %v543 = vld [vmem:[%s156 + $0xa60] sm:$0xff]
        %v544 = vld [vmem:[%s156 + $0xa68] sm:$0xff]
        %v545 = vld [vmem:[%s156 + $0xa70] sm:$0xff]
        %v546 = vld [vmem:[%s156 + $0xa78] sm:$0xff]
        %v547 = vld [vmem:[%s156 + $0xa80] sm:$0xff]
        %v548 = vld [vmem:[%s156 + $0xa88] sm:$0xff]
        %v549 = vld [vmem:[%s156 + $0xa90] sm:$0xff]
        %v550 = vld [vmem:[%s156 + $0xa98] sm:$0xff]
        %v551 = vld [vmem:[%s156 + $0xaa0] sm:$0xff]
        %v552 = vld [vmem:[%s156 + $0xaa8] sm:$0xff]
        %v553 = vld [vmem:[%s156 + $0xab0] sm:$0xff]
        %v554 = vld [vmem:[%s156 + $0xab8] sm:$0xff]
        %v555 = vld [vmem:[%s156 + $0xac0] sm:$0xff]
        %v556 = vld [vmem:[%s156 + $0xac8] sm:$0xff]
        %v557 = vld [vmem:[%s156 + $0xad0] sm:$0xff]
        %v558 = vld [vmem:[%s156 + $0xad8] sm:$0xff]
        %v559 = vld [vmem:[%s156 + $0xae0] sm:$0xff]
        %v560 = vld [vmem:[%s156 + $0xae8] sm:$0xff]
        %v561 = vld [vmem:[%s156 + $0xaf0] sm:$0xff]
        %v562 = vld [vmem:[%s156 + $0xaf8] sm:$0xff]
        %v563 = vld [vmem:[%s156 + $0xb00] sm:$0xff]
        %v564 = vld [vmem:[%s156 + $0xb08] sm:$0xff]
        %v565 = vld [vmem:[%s156 + $0xb10] sm:$0xff]
        %v566 = vld [vmem:[%s156 + $0xb18] sm:$0xff]
        %v567 = vld [vmem:[%s156 + $0xb20] sm:$0xff]
        %v568 = vld [vmem:[%s156 + $0xb28] sm:$0xff]
        %v569 = vld [vmem:[%s156 + $0xb30] sm:$0xff]
        %v570 = vld [vmem:[%s156 + $0xb38] sm:$0xff]
        %v571 = vld [vmem:[%s156 + $0xb40] sm:$0xff]
        %v572 = vld [vmem:[%s156 + $0xb48] sm:$0xff]
        %v573 = vld [vmem:[%s156 + $0xb50] sm:$0xff]
        %v574 = vld [vmem:[%s156 + $0xb58] sm:$0xff]
        %v575 = vld [vmem:[%s156 + $0xb60] sm:$0xff]
        %v576 = vld [vmem:[%s156 + $0xb68] sm:$0xff]
        %v577 = vld [vmem:[%s156 + $0xb70] sm:$0xff]
        %v578 = vld [vmem:[%s156 + $0xb78] sm:$0xff]
        %v579 = vld [vmem:[%s156 + $0xb80] sm:$0xff]
        %v580 = vld [vmem:[%s156 + $0xb88] sm:$0xff]
        %v581 = vld [vmem:[%s156 + $0xb90] sm:$0xff]
        %v582 = vld [vmem:[%s156 + $0xb98] sm:$0xff]
        %v583 = vld [vmem:[%s156 + $0xba0] sm:$0xff]
        %v584 = vld [vmem:[%s156 + $0xba8] sm:$0xff]
        %v585 = vld [vmem:[%s156 + $0xbb0] sm:$0xff]
        %v586 = vld [vmem:[%s156 + $0xbb8] sm:$0xff]
        %v587 = vld [vmem:[%s156 + $0xbc0] sm:$0xff]
        %v588 = vld [vmem:[%s156 + $0xbc8] sm:$0xff]
        %v589 = vld [vmem:[%s156 + $0xbd0] sm:$0xff]
        %v590 = vld [vmem:[%s156 + $0xbd8] sm:$0xff]
        %v591 = vld [vmem:[%s156 + $0xbe0] sm:$0xff]
        %v592 = vld [vmem:[%s156 + $0xbe8] sm:$0xff]
        %v593 = vld [vmem:[%s156 + $0xbf0] sm:$0xff]
        %v594 = vld [vmem:[%s156 + $0xbf8] sm:$0xff]
        %v595 = vld [vmem:[%s156 + $0xc00] sm:$0xff]
        %v596 = vld [vmem:[%s156 + $0xc08] sm:$0xff]
        %v597 = vld [vmem:[%s156 + $0xc10] sm:$0xff]
        %v598 = vld [vmem:[%s156 + $0xc18] sm:$0xff]
        %v599 = vld [vmem:[%s156 + $0xc20] sm:$0xff]
        %v600 = vld [vmem:[%s156 + $0xc28] sm:$0xff]
        %v601 = vld [vmem:[%s156 + $0xc30] sm:$0xff]
        %v602 = vld [vmem:[%s156 + $0xc38] sm:$0xff]
        %v603 = vld [vmem:[%s156 + $0xc40] sm:$0xff]
        %v604 = vld [vmem:[%s156 + $0xc48] sm:$0xff]
        %v605 = vld [vmem:[%s156 + $0xc50] sm:$0xff]
        %v606 = vld [vmem:[%s156 + $0xc58] sm:$0xff]
        %v607 = vld [vmem:[%s156 + $0xc60] sm:$0xff]
        %v608 = vld [vmem:[%s156 + $0xc68] sm:$0xff]
        %v609 = vld [vmem:[%s156 + $0xc70] sm:$0xff]
        %v610 = vld [vmem:[%s156 + $0xc78] sm:$0xff]
        %v611 = vld [vmem:[%s156 + $0xc80] sm:$0xff]
        %v612 = vld [vmem:[%s156 + $0xc88] sm:$0xff]
        %v613 = vld [vmem:[%s156 + $0xc90] sm:$0xff]
        %v614 = vld [vmem:[%s156 + $0xc98] sm:$0xff]
        %v615 = vld [vmem:[%s156 + $0xca0] sm:$0xff]
        %v616 = vld [vmem:[%s156 + $0xca8] sm:$0xff]
        %v617 = vld [vmem:[%s156 + $0xcb0] sm:$0xff]
        %v618 = vld [vmem:[%s156 + $0xcb8] sm:$0xff]
        %v619 = vld [vmem:[%s156 + $0xcc0] sm:$0xff]
        %v620 = vld [vmem:[%s156 + $0xcc8] sm:$0xff]
        %v621 = vld [vmem:[%s156 + $0xcd0] sm:$0xff]
        %v622 = vld [vmem:[%s156 + $0xcd8] sm:$0xff]
        %v623 = vld [vmem:[%s156 + $0xce0] sm:$0xff]
        %v624 = vld [vmem:[%s156 + $0xce8] sm:$0xff]
        %v625 = vld [vmem:[%s156 + $0xcf0] sm:$0xff]
        %v626 = vld [vmem:[%s156 + $0xcf8] sm:$0xff]
        %v627 = vld [vmem:[%s156 + $0xd00] sm:$0xff]
        %v628 = vld [vmem:[%s156 + $0xd08] sm:$0xff]
        %v629 = vld [vmem:[%s156 + $0xd10] sm:$0xff]
        %v630 = vld [vmem:[%s156 + $0xd18] sm:$0xff]
        %v631 = vld [vmem:[%s156 + $0xd20] sm:$0xff]
        %v632 = vld [vmem:[%s156 + $0xd28] sm:$0xff]
        %v633 = vld [vmem:[%s156 + $0xd30] sm:$0xff]
        %v634 = vld [vmem:[%s156 + $0xd38] sm:$0xff]
        %v635 = vld [vmem:[%s156 + $0xd40] sm:$0xff]
        %v636 = vld [vmem:[%s156 + $0xd48] sm:$0xff]
        %v637 = vld [vmem:[%s156 + $0xd50] sm:$0xff]
        %v638 = vld [vmem:[%s156 + $0xd58] sm:$0xff]
        %v639 = vld [vmem:[%s156 + $0xd60] sm:$0xff]
        %v640 = vld [vmem:[%s156 + $0xd68] sm:$0xff]
        %v641 = vld [vmem:[%s156 + $0xd70] sm:$0xff]
        %v642 = vld [vmem:[%s156 + $0xd78] sm:$0xff]
        %v643 = vld [vmem:[%s156 + $0xd80] sm:$0xff]
        %v644 = vld [vmem:[%s156 + $0xd88] sm:$0xff]
        %v645 = vld [vmem:[%s156 + $0xd90] sm:$0xff]
        %v646 = vld [vmem:[%s156 + $0xd98] sm:$0xff]
        %v647 = vld [vmem:[%s156 + $0xda0] sm:$0xff]
        %v648 = vld [vmem:[%s156 + $0xda8] sm:$0xff]
        %v649 = vld [vmem:[%s156 + $0xdb0] sm:$0xff]
        %v650 = vld [vmem:[%s156 + $0xdb8] sm:$0xff]
        %v651 = vld [vmem:[%s156 + $0xdc0] sm:$0xff]
        %v652 = vld [vmem:[%s156 + $0xdc8] sm:$0xff]
        %v653 = vld [vmem:[%s156 + $0xdd0] sm:$0xff]
        %v654 = vld [vmem:[%s156 + $0xdd8] sm:$0xff]
        %v655 = vld [vmem:[%s156 + $0xde0] sm:$0xff]
        %v656 = vld [vmem:[%s156 + $0xde8] sm:$0xff]
        %v657 = vld [vmem:[%s156 + $0xdf0] sm:$0xff]
        %v658 = vld [vmem:[%s156 + $0xdf8] sm:$0xff]
        %v659 = vld [vmem:[%s156 + $0xe00] sm:$0xff]
        %v660 = vld [vmem:[%s156 + $0xe08] sm:$0xff]
        %v661 = vld [vmem:[%s156 + $0xe10] sm:$0xff]
        %v662 = vld [vmem:[%s156 + $0xe18] sm:$0xff]
        %v663 = vld [vmem:[%s156 + $0xe20] sm:$0xff]
        %v664 = vld [vmem:[%s156 + $0xe28] sm:$0xff]
        %v665 = vld [vmem:[%s156 + $0xe30] sm:$0xff]
        %v666 = vld [vmem:[%s156 + $0xe38] sm:$0xff]
        %v667 = vld [vmem:[%s156 + $0xe40] sm:$0xff]
        %v668 = vld [vmem:[%s156 + $0xe48] sm:$0xff]
        %v669 = vld [vmem:[%s156 + $0xe50] sm:$0xff]
        %v670 = vld [vmem:[%s156 + $0xe58] sm:$0xff]
        %v671 = vld [vmem:[%s156 + $0xe60] sm:$0xff]
        %v672 = vld [vmem:[%s156 + $0xe68] sm:$0xff]
        %v673 = vld [vmem:[%s156 + $0xe70] sm:$0xff]
        %v674 = vld [vmem:[%s156 + $0xe78] sm:$0xff]
        %v675 = vld [vmem:[%s156 + $0xe80] sm:$0xff]
        %v676 = vld [vmem:[%s156 + $0xe88] sm:$0xff]
        %v677 = vld [vmem:[%s156 + $0xe90] sm:$0xff]
        %v678 = vld [vmem:[%s156 + $0xe98] sm:$0xff]
        %v679 = vld [vmem:[%s156 + $0xea0] sm:$0xff]
        %v680 = vld [vmem:[%s156 + $0xea8] sm:$0xff]
        %v681 = vld [vmem:[%s156 + $0xeb0] sm:$0xff]
        %v682 = vld [vmem:[%s156 + $0xeb8] sm:$0xff]
        %v683 = vld [vmem:[%s156 + $0xec0] sm:$0xff]
        %v684 = vld [vmem:[%s156 + $0xec8] sm:$0xff]
        %v685 = vld [vmem:[%s156 + $0xed0] sm:$0xff]
        %v686 = vld [vmem:[%s156 + $0xed8] sm:$0xff]
        %v687 = vld [vmem:[%s156 + $0xee0] sm:$0xff]
        %v688 = vld [vmem:[%s156 + $0xee8] sm:$0xff]
        %v689 = vld [vmem:[%s156 + $0xef0] sm:$0xff]
        %v690 = vld [vmem:[%s156 + $0xef8] sm:$0xff]
        %v691 = vld [vmem:[%s156 + $0xf00] sm:$0xff]
        %v692 = vld [vmem:[%s156 + $0xf08] sm:$0xff]
        %v693 = vld [vmem:[%s156 + $0xf10] sm:$0xff]
        %v694 = vld [vmem:[%s156 + $0xf18] sm:$0xff]
        %v695 = vld [vmem:[%s156 + $0xf20] sm:$0xff]
        %v696 = vld [vmem:[%s156 + $0xf28] sm:$0xff]
        %v697 = vld [vmem:[%s156 + $0xf30] sm:$0xff]
        %v698 = vld [vmem:[%s156 + $0xf38] sm:$0xff]
        %v699 = vld [vmem:[%s156 + $0xf40] sm:$0xff]
        %v700 = vld [vmem:[%s156 + $0xf48] sm:$0xff]
        %v701 = vld [vmem:[%s156 + $0xf50] sm:$0xff]
        %v702 = vld [vmem:[%s156 + $0xf58] sm:$0xff]
        %v703 = vld [vmem:[%s156 + $0xf60] sm:$0xff]
        %v704 = vld [vmem:[%s156 + $0xf68] sm:$0xff]
        %v705 = vld [vmem:[%s156 + $0xf70] sm:$0xff]
        %v706 = vld [vmem:[%s156 + $0xf78] sm:$0xff]
        %v707 = vld [vmem:[%s156 + $0xf80] sm:$0xff]
        %v708 = vld [vmem:[%s156 + $0xf88] sm:$0xff]
        %v709 = vld [vmem:[%s156 + $0xf90] sm:$0xff]
        %v710 = vld [vmem:[%s156 + $0xf98] sm:$0xff]
        %v711 = vld [vmem:[%s156 + $0xfa0] sm:$0xff]
        %v712 = vld [vmem:[%s156 + $0xfa8] sm:$0xff]
        %v713 = vld [vmem:[%s156 + $0xfb0] sm:$0xff]
        %v714 = vld [vmem:[%s156 + $0xfb8] sm:$0xff]
        %v715 = vld [vmem:[%s156 + $0xfc0] sm:$0xff]
        %v716 = vld [vmem:[%s156 + $0xfc8] sm:$0xff]
        %v717 = vld [vmem:[%s156 + $0xfd0] sm:$0xff]
        %v718 = vld [vmem:[%s156 + $0xfd8] sm:$0xff]
        %v719 = vld [vmem:[%s156 + $0xfe0] sm:$0xff]
        %v720 = vld [vmem:[%s156 + $0xfe8] sm:$0xff]
        %v721 = vld [vmem:[%s156 + $0xff0] sm:$0xff]
        %v722 = vld [vmem:[%s156 + $0xff8] sm:$0xff]
        %v723 = vld [vmem:[%s156 + $0x1000] sm:$0xff]
        %v724 = vld [vmem:[%s156 + $0x1008] sm:$0xff]
        %v725 = vld [vmem:[%s156 + $0x1010] sm:$0xff]
        %v726 = vld [vmem:[%s156 + $0x1018] sm:$0xff]
        %v727 = vld [vmem:[%s156 + $0x1020] sm:$0xff]
        %v728 = vld [vmem:[%s156 + $0x1028] sm:$0xff]
        %v729 = vld [vmem:[%s156 + $0x1030] sm:$0xff]
        %v730 = vld [vmem:[%s156 + $0x1038] sm:$0xff]
        %v731 = vld [vmem:[%s156 + $0x1040] sm:$0xff]
        %v732 = vld [vmem:[%s156 + $0x1048] sm:$0xff]
        %v733 = vld [vmem:[%s156 + $0x1050] sm:$0xff]
        %v734 = vld [vmem:[%s156 + $0x1058] sm:$0xff]
        %v735 = vld [vmem:[%s156 + $0x1060] sm:$0xff]
        %v736 = vld [vmem:[%s156 + $0x1068] sm:$0xff]
        %v737 = vld [vmem:[%s156 + $0x1070] sm:$0xff]
        %v738 = vld [vmem:[%s156 + $0x1078] sm:$0xff]
        %v739 = vld [vmem:[%s156 + $0x1080] sm:$0xff]
        %v740 = vld [vmem:[%s156 + $0x1088] sm:$0xff]
        %v741 = vld [vmem:[%s156 + $0x1090] sm:$0xff]
        %v742 = vld [vmem:[%s156 + $0x1098] sm:$0xff]
        %v743 = vld [vmem:[%s156 + $0x10a0] sm:$0xff]
        %v744 = vld [vmem:[%s156 + $0x10a8] sm:$0xff]
        %v745 = vld [vmem:[%s156 + $0x10b0] sm:$0xff]
        %v746 = vld [vmem:[%s156 + $0x10b8] sm:$0xff]
        %v747 = vld [vmem:[%s156 + $0x10c0] sm:$0xff]
        %v748 = vld [vmem:[%s156 + $0x10c8] sm:$0xff]
        %v749 = vld [vmem:[%s156 + $0x10d0] sm:$0xff]
        %v750 = vld [vmem:[%s156 + $0x10d8] sm:$0xff]
        %v751 = vld [vmem:[%s156 + $0x10e0] sm:$0xff]
        %v752 = vld [vmem:[%s156 + $0x10e8] sm:$0xff]
        %v753 = vld [vmem:[%s156 + $0x10f0] sm:$0xff]
        %v754 = vld [vmem:[%s156 + $0x10f8] sm:$0xff]
        %v755 = vld [vmem:[%s156 + $0x1100] sm:$0xff]
        %v756 = vld [vmem:[%s156 + $0x1108] sm:$0xff]
        %v757 = vld [vmem:[%s156 + $0x1110] sm:$0xff]
        %v758 = vld [vmem:[%s156 + $0x1118] sm:$0xff]
        %v759 = vld [vmem:[%s156 + $0x1120] sm:$0xff]
        %v760 = vld [vmem:[%s156 + $0x1128] sm:$0xff]
        %v761 = vld [vmem:[%s156 + $0x1130] sm:$0xff]
        %v762 = vld [vmem:[%s156 + $0x1138] sm:$0xff]
        %v763 = vld [vmem:[%s156 + $0x1140] sm:$0xff]
        %v764 = vld [vmem:[%s156 + $0x1148] sm:$0xff]
        %v765 = vld [vmem:[%s156 + $0x1150] sm:$0xff]
        %v766 = vld [vmem:[%s156 + $0x1158] sm:$0xff]
        %v767 = vld [vmem:[%s156 + $0x1160] sm:$0xff]
        %v768 = vld [vmem:[%s156 + $0x1168] sm:$0xff]
        %v769 = vld [vmem:[%s156 + $0x1170] sm:$0xff]
        %v770 = vld [vmem:[%s156 + $0x1178] sm:$0xff]
        %v771 = vld [vmem:[%s156 + $0x1180] sm:$0xff]
        %v772 = vld [vmem:[%s156 + $0x1188] sm:$0xff]
        %v773 = vld [vmem:[%s156 + $0x1190] sm:$0xff]
        %v774 = vld [vmem:[%s156 + $0x1198] sm:$0xff]
        %v775 = vld [vmem:[%s156 + $0x11a0] sm:$0xff]
        %v776 = vld [vmem:[%s156 + $0x11a8] sm:$0xff]
        %v777 = vld [vmem:[%s156 + $0x11b0] sm:$0xff]
        %v778 = vld [vmem:[%s156 + $0x11b8] sm:$0xff]
        %v779 = vld [vmem:[%s156 + $0x11c0] sm:$0xff]
        %v780 = vld [vmem:[%s156 + $0x11c8] sm:$0xff]
        %v781 = vld [vmem:[%s156 + $0x11d0] sm:$0xff]
        %v782 = vld [vmem:[%s156 + $0x11d8] sm:$0xff]
        %v783 = vld [vmem:[%s156 + $0x11e0] sm:$0xff]
        %v784 = vld [vmem:[%s156 + $0x11e8] sm:$0xff]
        %v785 = vld [vmem:[%s156 + $0x11f0] sm:$0xff]
        %v786 = vld [vmem:[%s156 + $0x11f8] sm:$0xff]
        %v787 = vld [vmem:[%s156 + $0x1200] sm:$0xff]
        %v788 = vld [vmem:[%s156 + $0x1208] sm:$0xff]
        %v789 = vld [vmem:[%s156 + $0x1210] sm:$0xff]
        %v790 = vld [vmem:[%s156 + $0x1218] sm:$0xff]
        %v791 = vld [vmem:[%s156 + $0x1220] sm:$0xff]
        %v792 = vld [vmem:[%s156 + $0x1228] sm:$0xff]
        %v793 = vld [vmem:[%s156 + $0x1230] sm:$0xff]
        %v794 = vld [vmem:[%s156 + $0x1238] sm:$0xff]
        %v795 = vld [vmem:[%s156 + $0x1240] sm:$0xff]
        %v796 = vld [vmem:[%s156 + $0x1248] sm:$0xff]
        %v797 = vld [vmem:[%s156 + $0x1250] sm:$0xff]
        %v798 = vld [vmem:[%s156 + $0x1258] sm:$0xff]
        %v799 = vld [vmem:[%s156 + $0x1260] sm:$0xff]
        %v800 = vld [vmem:[%s156 + $0x1268] sm:$0xff]
        %v801 = vld [vmem:[%s156 + $0x1270] sm:$0xff]
        %v802 = vld [vmem:[%s156 + $0x1278] sm:$0xff]
        %v803 = vld [vmem:[%s156 + $0x1280] sm:$0xff]
        %v804 = vld [vmem:[%s156 + $0x1288] sm:$0xff]
        %v805 = vld [vmem:[%s156 + $0x1290] sm:$0xff]
        %v806 = vld [vmem:[%s156 + $0x1298] sm:$0xff]
        %v807 = vld [vmem:[%s156 + $0x12a0] sm:$0xff]
        %v808 = vld [vmem:[%s156 + $0x12a8] sm:$0xff]
        %v809 = vld [vmem:[%s156 + $0x12b0] sm:$0xff]
        %v810 = vld [vmem:[%s156 + $0x12b8] sm:$0xff]
        %v811 = vld [vmem:[%s156 + $0x12c0] sm:$0xff]
        %v812 = vld [vmem:[%s156 + $0x12c8] sm:$0xff]
        %v813 = vld [vmem:[%s156 + $0x12d0] sm:$0xff]
        %v814 = vld [vmem:[%s156 + $0x12d8] sm:$0xff]
        %v815 = vld [vmem:[%s156 + $0x12e0] sm:$0xff]
        %v816 = vld [vmem:[%s156 + $0x12e8] sm:$0xff]
        %v817 = vld [vmem:[%s156 + $0x12f0] sm:$0xff]
        %v818 = vld [vmem:[%s156 + $0x12f8] sm:$0xff]
        %v819 = vld [vmem:[%s156 + $0x1300] sm:$0xff]
        %v820 = vld [vmem:[%s156 + $0x1308] sm:$0xff]
        %v821 = vld [vmem:[%s156 + $0x1310] sm:$0xff]
        %v822 = vld [vmem:[%s156 + $0x1318] sm:$0xff]
        %v823 = vld [vmem:[%s156 + $0x1320] sm:$0xff]
        %v824 = vld [vmem:[%s156 + $0x1328] sm:$0xff]
        %v825 = vld [vmem:[%s156 + $0x1330] sm:$0xff]
        %v826 = vld [vmem:[%s156 + $0x1338] sm:$0xff]
        %v827 = vld [vmem:[%s156 + $0x1340] sm:$0xff]
        %v828 = vld [vmem:[%s156 + $0x1348] sm:$0xff]
        %v829 = vld [vmem:[%s156 + $0x1350] sm:$0xff]
        %v830 = vld [vmem:[%s156 + $0x1358] sm:$0xff]
        %v831 = vld [vmem:[%s156 + $0x1360] sm:$0xff]
        %v832 = vld [vmem:[%s156 + $0x1368] sm:$0xff]
        %v833 = vld [vmem:[%s156 + $0x1370] sm:$0xff]
        %v834 = vld [vmem:[%s156 + $0x1378] sm:$0xff]
        %v835 = vld [vmem:[%s156 + $0x1380] sm:$0xff]
        %v836 = vld [vmem:[%s156 + $0x1388] sm:$0xff]
        %v837 = vld [vmem:[%s156 + $0x1390] sm:$0xff]
        %v838 = vld [vmem:[%s156 + $0x1398] sm:$0xff]
        %v839 = vld [vmem:[%s156 + $0x13a0] sm:$0xff]
        %v840 = vld [vmem:[%s156 + $0x13a8] sm:$0xff]
        %v841 = vld [vmem:[%s156 + $0x13b0] sm:$0xff]
        %v842 = vld [vmem:[%s156 + $0x13b8] sm:$0xff]
        %v843 = vld [vmem:[%s156 + $0x13c0] sm:$0xff]
        %v844 = vld [vmem:[%s156 + $0x13c8] sm:$0xff]
        %v845 = vld [vmem:[%s156 + $0x13d0] sm:$0xff]
        %v846 = vld [vmem:[%s156 + $0x13d8] sm:$0xff]
        %v847 = vld [vmem:[%s156 + $0x13e0] sm:$0xff]
        %v848 = vld [vmem:[%s156 + $0x13e8] sm:$0xff]
        %v849 = vld [vmem:[%s156 + $0x13f0] sm:$0xff]
        %v850 = vld [vmem:[%s156 + $0x13f8] sm:$0xff]
        %v851 = vld [vmem:[%s156 + $0x1400] sm:$0xff]
        %v852 = vld [vmem:[%s156 + $0x1408] sm:$0xff]
        %v853 = vld [vmem:[%s156 + $0x1410] sm:$0xff]
        %v854 = vld [vmem:[%s156 + $0x1418] sm:$0xff]
        %v855 = vld [vmem:[%s156 + $0x1420] sm:$0xff]
        %v856 = vld [vmem:[%s156 + $0x1428] sm:$0xff]
        %v857 = vld [vmem:[%s156 + $0x1430] sm:$0xff]
        %v858 = vld [vmem:[%s156 + $0x1438] sm:$0xff]
        %v859 = vld [vmem:[%s156 + $0x1440] sm:$0xff]
        %v860 = vld [vmem:[%s156 + $0x1448] sm:$0xff]
        %v861 = vld [vmem:[%s156 + $0x1450] sm:$0xff]
        %v862 = vld [vmem:[%s156 + $0x1458] sm:$0xff]
        %v863 = vld [vmem:[%s156 + $0x1460] sm:$0xff]
        %v864 = vld [vmem:[%s156 + $0x1468] sm:$0xff]
        %v865 = vld [vmem:[%s156 + $0x1470] sm:$0xff]
        %v866 = vld [vmem:[%s156 + $0x1478] sm:$0xff]
        %v867 = vld [vmem:[%s156 + $0x1480] sm:$0xff]
        %v868 = vld [vmem:[%s156 + $0x1488] sm:$0xff]
        %v869 = vld [vmem:[%s156 + $0x1490] sm:$0xff]
        %v870 = vld [vmem:[%s156 + $0x1498] sm:$0xff]
        %v871 = vld [vmem:[%s156 + $0x14a0] sm:$0xff]
        %v872 = vld [vmem:[%s156 + $0x14a8] sm:$0xff]
        %v873 = vld [vmem:[%s156 + $0x14b0] sm:$0xff]
        %v874 = vld [vmem:[%s156 + $0x14b8] sm:$0xff]
        %v875 = vld [vmem:[%s156 + $0x14c0] sm:$0xff]
        %v876 = vld [vmem:[%s156 + $0x14c8] sm:$0xff]
        %v877 = vld [vmem:[%s156 + $0x14d0] sm:$0xff]
        %v878 = vld [vmem:[%s156 + $0x14d8] sm:$0xff]
        %v879 = vld [vmem:[%s156 + $0x14e0] sm:$0xff]
        %v880 = vld [vmem:[%s156 + $0x14e8] sm:$0xff]
        %v881 = vld [vmem:[%s156 + $0x14f0] sm:$0xff]
        %v882 = vld [vmem:[%s156 + $0x14f8] sm:$0xff]
        %v883 = vld [vmem:[%s156 + $0x1500] sm:$0xff]
        %v884 = vld [vmem:[%s156 + $0x1508] sm:$0xff]
        %v885 = vld [vmem:[%s156 + $0x1510] sm:$0xff]
        %v886 = vld [vmem:[%s156 + $0x1518] sm:$0xff]
        %v887 = vld [vmem:[%s156 + $0x1520] sm:$0xff]
        %v888 = vld [vmem:[%s156 + $0x1528] sm:$0xff]
        %v889 = vld [vmem:[%s156 + $0x1530] sm:$0xff]
        %v890 = vld [vmem:[%s156 + $0x1538] sm:$0xff]
        %v891 = vld [vmem:[%s156 + $0x1540] sm:$0xff]
        %v892 = vld [vmem:[%s156 + $0x1548] sm:$0xff]
        %v893 = vld [vmem:[%s156 + $0x1550] sm:$0xff]
        %v894 = vld [vmem:[%s156 + $0x1558] sm:$0xff]
        %v895 = vld [vmem:[%s156 + $0x1560] sm:$0xff]
        %v896 = vld [vmem:[%s156 + $0x1568] sm:$0xff]
        %v897 = vld [vmem:[%s156 + $0x1570] sm:$0xff]
        %v898 = vld [vmem:[%s156 + $0x1578] sm:$0xff]
        %v899 = vld [vmem:[%s156 + $0x1580] sm:$0xff]
        %v900 = vld [vmem:[%s156 + $0x1588] sm:$0xff]
        %v901 = vld [vmem:[%s156 + $0x1590] sm:$0xff]
        %v902 = vld [vmem:[%s156 + $0x1598] sm:$0xff]
        %v903 = vld [vmem:[%s156 + $0x15a0] sm:$0xff]
        %v904 = vld [vmem:[%s156 + $0x15a8] sm:$0xff]
        %v905 = vld [vmem:[%s156 + $0x15b0] sm:$0xff]
        %v906 = vld [vmem:[%s156 + $0x15b8] sm:$0xff]
        %v907 = vld [vmem:[%s156 + $0x15c0] sm:$0xff]
        %v908 = vld [vmem:[%s156 + $0x15c8] sm:$0xff]
        %v909 = vld [vmem:[%s156 + $0x15d0] sm:$0xff]
        %v910 = vld [vmem:[%s156 + $0x15d8] sm:$0xff]
        %v911 = vld [vmem:[%s156 + $0x15e0] sm:$0xff]
        %v912 = vld [vmem:[%s156 + $0x15e8] sm:$0xff]
        %v913 = vld [vmem:[%s156 + $0x15f0] sm:$0xff]
        %v914 = vld [vmem:[%s156 + $0x15f8] sm:$0xff]
        %v915 = vld [vmem:[%s156 + $0x1600] sm:$0xff]
        %v916 = vld [vmem:[%s156 + $0x1608] sm:$0xff]
        %v917 = vld [vmem:[%s156 + $0x1610] sm:$0xff]
        %v918 = vld [vmem:[%s156 + $0x1618] sm:$0xff]
        %v919 = vld [vmem:[%s156 + $0x1620] sm:$0xff]
        %v920 = vld [vmem:[%s156 + $0x1628] sm:$0xff]
        %v921 = vld [vmem:[%s156 + $0x1630] sm:$0xff]
        %v922 = vld [vmem:[%s156 + $0x1638] sm:$0xff]
        %v923 = vld [vmem:[%s156 + $0x1640] sm:$0xff]
        %v924 = vld [vmem:[%s156 + $0x1648] sm:$0xff]
        %v925 = vld [vmem:[%s156 + $0x1650] sm:$0xff]
        %v926 = vld [vmem:[%s156 + $0x1658] sm:$0xff]
        %v927 = vld [vmem:[%s156 + $0x1660] sm:$0xff]
        %v928 = vld [vmem:[%s156 + $0x1668] sm:$0xff]
        %v929 = vld [vmem:[%s156 + $0x1670] sm:$0xff]
        %v930 = vld [vmem:[%s156 + $0x1678] sm:$0xff]
        %v931 = vld [vmem:[%s156 + $0x1680] sm:$0xff]
        %v932 = vld [vmem:[%s156 + $0x1688] sm:$0xff]
        %v933 = vld [vmem:[%s156 + $0x1690] sm:$0xff]
        %v934 = vld [vmem:[%s156 + $0x1698] sm:$0xff]
        %v935 = vld [vmem:[%s156 + $0x16a0] sm:$0xff]
        %v936 = vld [vmem:[%s156 + $0x16a8] sm:$0xff]
        %v937 = vld [vmem:[%s156 + $0x16b0] sm:$0xff]
        %v938 = vld [vmem:[%s156 + $0x16b8] sm:$0xff]
        %v939 = vld [vmem:[%s156 + $0x16c0] sm:$0xff]
        %v940 = vld [vmem:[%s156 + $0x16c8] sm:$0xff]
        %v941 = vld [vmem:[%s156 + $0x16d0] sm:$0xff]
        %v942 = vld [vmem:[%s156 + $0x16d8] sm:$0xff]
        %v943 = vld [vmem:[%s156 + $0x16e0] sm:$0xff]
        %v944 = vld [vmem:[%s156 + $0x16e8] sm:$0xff]
        %v945 = vld [vmem:[%s156 + $0x16f0] sm:$0xff]
        %v946 = vld [vmem:[%s156 + $0x16f8] sm:$0xff]
        %v947 = vld [vmem:[%s156 + $0x1700] sm:$0xff]
        %v948 = vld [vmem:[%s156 + $0x1708] sm:$0xff]
        %v949 = vld [vmem:[%s156 + $0x1710] sm:$0xff]
        %v950 = vld [vmem:[%s156 + $0x1718] sm:$0xff]
        %v951 = vld [vmem:[%s156 + $0x1720] sm:$0xff]
        %v952 = vld [vmem:[%s156 + $0x1728] sm:$0xff]
        %v953 = vld [vmem:[%s156 + $0x1730] sm:$0xff]
        %v954 = vld [vmem:[%s156 + $0x1738] sm:$0xff]
        %v955 = vld [vmem:[%s156 + $0x1740] sm:$0xff]
        %v956 = vld [vmem:[%s156 + $0x1748] sm:$0xff]
        %v957 = vld [vmem:[%s156 + $0x1750] sm:$0xff]
        %v958 = vld [vmem:[%s156 + $0x1758] sm:$0xff]
        %v959 = vld [vmem:[%s156 + $0x1760] sm:$0xff]
        %v960 = vld [vmem:[%s156 + $0x1768] sm:$0xff]
        %v961 = vld [vmem:[%s156 + $0x1770] sm:$0xff]
        %v962 = vld [vmem:[%s156 + $0x1778] sm:$0xff]
        %v963 = vld [vmem:[%s156 + $0x1780] sm:$0xff]
        %v964 = vld [vmem:[%s156 + $0x1788] sm:$0xff]
        %v965 = vld [vmem:[%s156 + $0x1790] sm:$0xff]
        %v966 = vld [vmem:[%s156 + $0x1798] sm:$0xff]
        %v967 = vld [vmem:[%s156 + $0x17a0] sm:$0xff]
        %v968 = vld [vmem:[%s156 + $0x17a8] sm:$0xff]
        %v969 = vld [vmem:[%s156 + $0x17b0] sm:$0xff]
        %v970 = vld [vmem:[%s156 + $0x17b8] sm:$0xff]
        %v971 = vld [vmem:[%s156 + $0x17c0] sm:$0xff]
        %v972 = vld [vmem:[%s156 + $0x17c8] sm:$0xff]
        %v973 = vld [vmem:[%s156 + $0x17d0] sm:$0xff]
        %v974 = vld [vmem:[%s156 + $0x17d8] sm:$0xff]
        %v975 = vld [vmem:[%s156 + $0x17e0] sm:$0xff]
        %v976 = vld [vmem:[%s156 + $0x17e8] sm:$0xff]
        %v977 = vld [vmem:[%s156 + $0x17f0] sm:$0xff]
        %v978 = vld [vmem:[%s156 + $0x17f8] sm:$0xff]
        %v979 = vld [vmem:[%s156 + $0x1800] sm:$0xff]
        %v980 = vld [vmem:[%s156 + $0x1808] sm:$0xff]
        %v981 = vld [vmem:[%s156 + $0x1810] sm:$0xff]
        %v982 = vld [vmem:[%s156 + $0x1818] sm:$0xff]
        %v983 = vld [vmem:[%s156 + $0x1820] sm:$0xff]
        %v984 = vld [vmem:[%s156 + $0x1828] sm:$0xff]
        %v985 = vld [vmem:[%s156 + $0x1830] sm:$0xff]
        %v986 = vld [vmem:[%s156 + $0x1838] sm:$0xff]
        %v987 = vld [vmem:[%s156 + $0x1840] sm:$0xff]
        %v988 = vld [vmem:[%s156 + $0x1848] sm:$0xff]
        %v989 = vld [vmem:[%s156 + $0x1850] sm:$0xff]
        %v990 = vld [vmem:[%s156 + $0x1858] sm:$0xff]
        %v991 = vld [vmem:[%s156 + $0x1860] sm:$0xff]
        %v992 = vld [vmem:[%s156 + $0x1868] sm:$0xff]
        %v993 = vld [vmem:[%s156 + $0x1870] sm:$0xff]
        %v994 = vld [vmem:[%s156 + $0x1878] sm:$0xff]
        %v995 = vld [vmem:[%s156 + $0x1880] sm:$0xff]
        %v996 = vld [vmem:[%s156 + $0x1888] sm:$0xff]
        %v997 = vld [vmem:[%s156 + $0x1890] sm:$0xff]
        %v998 = vld [vmem:[%s156 + $0x1898] sm:$0xff]
        %v999 = vld [vmem:[%s156 + $0x18a0] sm:$0xff]
        %v1000 = vld [vmem:[%s156 + $0x18a8] sm:$0xff]
        %v1001 = vld [vmem:[%s156 + $0x18b0] sm:$0xff]
        %v1002 = vld [vmem:[%s156 + $0x18b8] sm:$0xff]
        %v1003 = vld [vmem:[%s156 + $0x18c0] sm:$0xff]
        %v1004 = vld [vmem:[%s156 + $0x18c8] sm:$0xff]
        %v1005 = vld [vmem:[%s156 + $0x18d0] sm:$0xff]
        %v1006 = vld [vmem:[%s156 + $0x18d8] sm:$0xff]
        %v1007 = vld [vmem:[%s156 + $0x18e0] sm:$0xff]
        %v1008 = vld [vmem:[%s156 + $0x18e8] sm:$0xff]
        %v1009 = vld [vmem:[%s156 + $0x18f0] sm:$0xff]
        %v1010 = vld [vmem:[%s156 + $0x18f8] sm:$0xff]
        %v1011 = vld [vmem:[%s156 + $0x1900] sm:$0xff]
        %v1012 = vld [vmem:[%s156 + $0x1908] sm:$0xff]
        %v1013 = vld [vmem:[%s156 + $0x1910] sm:$0xff]
        %v1014 = vld [vmem:[%s156 + $0x1918] sm:$0xff]
        %v1015 = vld [vmem:[%s156 + $0x1920] sm:$0xff]
        %v1016 = vld [vmem:[%s156 + $0x1928] sm:$0xff]
        %v1017 = vld [vmem:[%s156 + $0x1930] sm:$0xff]
        %v1018 = vld [vmem:[%s156 + $0x1938] sm:$0xff]
        %v1019 = vld [vmem:[%s156 + $0x1940] sm:$0xff]
        %v1020 = vld [vmem:[%s156 + $0x1948] sm:$0xff]
        %v1021 = vld [vmem:[%s156 + $0x1950] sm:$0xff]
        %v1022 = vld [vmem:[%s156 + $0x1958] sm:$0xff]
        %v1023 = vld [vmem:[%s156 + $0x1960] sm:$0xff]
        %v1024 = vld [vmem:[%s156 + $0x1968] sm:$0xff]
        %v1025 = vld [vmem:[%s156 + $0x1970] sm:$0xff]
        %v1026 = vld [vmem:[%s156 + $0x1978] sm:$0xff]
        %v1027 = vld [vmem:[%s156 + $0x1980] sm:$0xff]
        %v1028 = vld [vmem:[%s156 + $0x1988] sm:$0xff]
        %v1029 = vld [vmem:[%s156 + $0x1990] sm:$0xff]
        %v1030 = vld [vmem:[%s156 + $0x1998] sm:$0xff]
        %v1031 = vld [vmem:[%s156 + $0x19a0] sm:$0xff]
        %v1032 = vld [vmem:[%s156 + $0x19a8] sm:$0xff]
        %v1033 = vld [vmem:[%s156 + $0x19b0] sm:$0xff]
        %v1034 = vld [vmem:[%s156 + $0x19b8] sm:$0xff]
        %v1035 = vld [vmem:[%s156 + $0x19c0] sm:$0xff]
        %v1036 = vld [vmem:[%s156 + $0x19c8] sm:$0xff]
        %v1037 = vld [vmem:[%s156 + $0x19d0] sm:$0xff]
        %v1038 = vld [vmem:[%s156 + $0x19d8] sm:$0xff]
        %v1039 = vld [vmem:[%s156 + $0x19e0] sm:$0xff]
        %v1040 = vld [vmem:[%s156 + $0x19e8] sm:$0xff]
        %v1041 = vld [vmem:[%s156 + $0x19f0] sm:$0xff]
        %v1042 = vld [vmem:[%s156 + $0x19f8] sm:$0xff]
        %v1043 = vld [vmem:[%s156 + $0x1a00] sm:$0xff]
        %v1044 = vld [vmem:[%s156 + $0x1a08] sm:$0xff]
        %v1045 = vld [vmem:[%s156 + $0x1a10] sm:$0xff]
        %v1046 = vld [vmem:[%s156 + $0x1a18] sm:$0xff]
        %v1047 = vld [vmem:[%s156 + $0x1a20] sm:$0xff]
        %v1048 = vld [vmem:[%s156 + $0x1a28] sm:$0xff]
        %v1049 = vld [vmem:[%s156 + $0x1a30] sm:$0xff]
        %v1050 = vld [vmem:[%s156 + $0x1a38] sm:$0xff]
        %v1051 = vld [vmem:[%s156 + $0x1a40] sm:$0xff]
        %v1052 = vld [vmem:[%s156 + $0x1a48] sm:$0xff]
        %v1053 = vld [vmem:[%s156 + $0x1a50] sm:$0xff]
        %v1054 = vld [vmem:[%s156 + $0x1a58] sm:$0xff]
        %v1055 = vld [vmem:[%s156 + $0x1a60] sm:$0xff]
        %v1056 = vld [vmem:[%s156 + $0x1a68] sm:$0xff]
        %v1057 = vld [vmem:[%s156 + $0x1a70] sm:$0xff]
        %v1058 = vld [vmem:[%s156 + $0x1a78] sm:$0xff]
        %v1059 = vld [vmem:[%s156 + $0x1a80] sm:$0xff]
        %v1060 = vld [vmem:[%s156 + $0x1a88] sm:$0xff]
        %v1061 = vld [vmem:[%s156 + $0x1a90] sm:$0xff]
        %v1062 = vld [vmem:[%s156 + $0x1a98] sm:$0xff]
        %v1063 = vld [vmem:[%s156 + $0x1aa0] sm:$0xff]
        %v1064 = vld [vmem:[%s156 + $0x1aa8] sm:$0xff]
        %v1065 = vld [vmem:[%s156 + $0x1ab0] sm:$0xff]
        %v1066 = vld [vmem:[%s156 + $0x1ab8] sm:$0xff]
        %v1067 = vld [vmem:[%s156 + $0x1ac0] sm:$0xff]
        %v1068 = vld [vmem:[%s156 + $0x1ac8] sm:$0xff]
        %v1069 = vld [vmem:[%s156 + $0x1ad0] sm:$0xff]
        %v1070 = vld [vmem:[%s156 + $0x1ad8] sm:$0xff]
        %v1071 = vld [vmem:[%s156 + $0x1ae0] sm:$0xff]
        %v1072 = vld [vmem:[%s156 + $0x1ae8] sm:$0xff]
        %v1073 = vld [vmem:[%s156 + $0x1af0] sm:$0xff]
        %v1074 = vld [vmem:[%s156 + $0x1af8] sm:$0xff]
        %v1075 = vld [vmem:[%s156 + $0x1b00] sm:$0xff]
        %v1076 = vld [vmem:[%s156 + $0x1b08] sm:$0xff]
        %v1077 = vld [vmem:[%s156 + $0x1b10] sm:$0xff]
        %v1078 = vld [vmem:[%s156 + $0x1b18] sm:$0xff]
        %v1079 = vld [vmem:[%s156 + $0x1b20] sm:$0xff]
        %v1080 = vld [vmem:[%s156 + $0x1b28] sm:$0xff]
        %v1081 = vld [vmem:[%s156 + $0x1b30] sm:$0xff]
        %v1082 = vld [vmem:[%s156 + $0x1b38] sm:$0xff]
        %v1083 = vld [vmem:[%s156 + $0x1b40] sm:$0xff]
        %v1084 = vld [vmem:[%s156 + $0x1b48] sm:$0xff]
        %v1085 = vld [vmem:[%s156 + $0x1b50] sm:$0xff]
        %v1086 = vld [vmem:[%s156 + $0x1b58] sm:$0xff]
        %v1087 = vld [vmem:[%s156 + $0x1b60] sm:$0xff]
        %v1088 = vld [vmem:[%s156 + $0x1b68] sm:$0xff]
        %v1089 = vld [vmem:[%s156 + $0x1b70] sm:$0xff]
        %v1090 = vld [vmem:[%s156 + $0x1b78] sm:$0xff]
        %v1091 = vld [vmem:[%s156 + $0x1b80] sm:$0xff]
        %v1092 = vld [vmem:[%s156 + $0x1b88] sm:$0xff]
        %v1093 = vld [vmem:[%s156 + $0x1b90] sm:$0xff]
        %v1094 = vld [vmem:[%s156 + $0x1b98] sm:$0xff]
        %v1095 = vld [vmem:[%s156 + $0x1ba0] sm:$0xff]
        %v1096 = vld [vmem:[%s156 + $0x1ba8] sm:$0xff]
        %v1097 = vld [vmem:[%s156 + $0x1bb0] sm:$0xff]
        %v1098 = vld [vmem:[%s156 + $0x1bb8] sm:$0xff]
        %v1099 = vld [vmem:[%s156 + $0x1bc0] sm:$0xff]
        %v1100 = vld [vmem:[%s156 + $0x1bc8] sm:$0xff]
        %v1101 = vld [vmem:[%s156 + $0x1bd0] sm:$0xff]
        %v1102 = vld [vmem:[%s156 + $0x1bd8] sm:$0xff]
        %v1103 = vld [vmem:[%s156 + $0x1be0] sm:$0xff]
        %v1104 = vld [vmem:[%s156 + $0x1be8] sm:$0xff]
        %v1105 = vld [vmem:[%s156 + $0x1bf0] sm:$0xff]
        %v1106 = vld [vmem:[%s156 + $0x1bf8] sm:$0xff]
        %v1107 = vld [vmem:[%s156 + $0x1c00] sm:$0xff]
        %v1108 = vld [vmem:[%s156 + $0x1c08] sm:$0xff]
        %v1109 = vld [vmem:[%s156 + $0x1c10] sm:$0xff]
        %v1110 = vld [vmem:[%s156 + $0x1c18] sm:$0xff]
        %v1111 = vld [vmem:[%s156 + $0x1c20] sm:$0xff]
        %v1112 = vld [vmem:[%s156 + $0x1c28] sm:$0xff]
        %v1113 = vld [vmem:[%s156 + $0x1c30] sm:$0xff]
        %v1114 = vld [vmem:[%s156 + $0x1c38] sm:$0xff]
        %v1115 = vld [vmem:[%s156 + $0x1c40] sm:$0xff]
        %v1116 = vld [vmem:[%s156 + $0x1c48] sm:$0xff]
        %v1117 = vld [vmem:[%s156 + $0x1c50] sm:$0xff]
        %v1118 = vld [vmem:[%s156 + $0x1c58] sm:$0xff]
        %v1119 = vld [vmem:[%s156 + $0x1c60] sm:$0xff]
        %v1120 = vld [vmem:[%s156 + $0x1c68] sm:$0xff]
        %v1121 = vld [vmem:[%s156 + $0x1c70] sm:$0xff]
        %v1122 = vld [vmem:[%s156 + $0x1c78] sm:$0xff]
        %v1123 = vld [vmem:[%s156 + $0x1c80] sm:$0xff]
        %v1124 = vld [vmem:[%s156 + $0x1c88] sm:$0xff]
        %v1125 = vld [vmem:[%s156 + $0x1c90] sm:$0xff]
        %v1126 = vld [vmem:[%s156 + $0x1c98] sm:$0xff]
        %v1127 = vld [vmem:[%s156 + $0x1ca0] sm:$0xff]
        %v1128 = vld [vmem:[%s156 + $0x1ca8] sm:$0xff]
        %v1129 = vld [vmem:[%s156 + $0x1cb0] sm:$0xff]
        %v1130 = vld [vmem:[%s156 + $0x1cb8] sm:$0xff]
        %v1131 = vld [vmem:[%s156 + $0x1cc0] sm:$0xff]
        %v1132 = vld [vmem:[%s156 + $0x1cc8] sm:$0xff]
        %v1133 = vld [vmem:[%s156 + $0x1cd0] sm:$0xff]
        %v1134 = vld [vmem:[%s156 + $0x1cd8] sm:$0xff]
        %v1135 = vld [vmem:[%s156 + $0x1ce0] sm:$0xff]
        %v1136 = vld [vmem:[%s156 + $0x1ce8] sm:$0xff]
        %v1137 = vld [vmem:[%s156 + $0x1cf0] sm:$0xff]
        %v1138 = vld [vmem:[%s156 + $0x1cf8] sm:$0xff]
        %v1139 = vld [vmem:[%s156 + $0x1d00] sm:$0xff]
        %v1140 = vld [vmem:[%s156 + $0x1d08] sm:$0xff]
        %v1141 = vld [vmem:[%s156 + $0x1d10] sm:$0xff]
        %v1142 = vld [vmem:[%s156 + $0x1d18] sm:$0xff]
        %v1143 = vld [vmem:[%s156 + $0x1d20] sm:$0xff]
        %v1144 = vld [vmem:[%s156 + $0x1d28] sm:$0xff]
        %v1145 = vld [vmem:[%s156 + $0x1d30] sm:$0xff]
        %v1146 = vld [vmem:[%s156 + $0x1d38] sm:$0xff]
        %v1147 = vld [vmem:[%s156 + $0x1d40] sm:$0xff]
        %v1148 = vld [vmem:[%s156 + $0x1d48] sm:$0xff]
        %v1149 = vld [vmem:[%s156 + $0x1d50] sm:$0xff]
        %v1150 = vld [vmem:[%s156 + $0x1d58] sm:$0xff]
        %v1151 = vld [vmem:[%s156 + $0x1d60] sm:$0xff]
        %v1152 = vld [vmem:[%s156 + $0x1d68] sm:$0xff]
        %v1153 = vld [vmem:[%s156 + $0x1d70] sm:$0xff]
        %v1154 = vld [vmem:[%s156 + $0x1d78] sm:$0xff]
        %v1155 = vld [vmem:[%s156 + $0x1d80] sm:$0xff]
        %v1156 = vld [vmem:[%s156 + $0x1d88] sm:$0xff]
        %v1157 = vld [vmem:[%s156 + $0x1d90] sm:$0xff]
        %v1158 = vld [vmem:[%s156 + $0x1d98] sm:$0xff]
        %v1159 = vld [vmem:[%s156 + $0x1da0] sm:$0xff]
        %v1160 = vld [vmem:[%s156 + $0x1da8] sm:$0xff]
        %v1161 = vld [vmem:[%s156 + $0x1db0] sm:$0xff]
        %v1162 = vld [vmem:[%s156 + $0x1db8] sm:$0xff]
        %v1163 = vld [vmem:[%s156 + $0x1dc0] sm:$0xff]
        %v1164 = vld [vmem:[%s156 + $0x1dc8] sm:$0xff]
        %v1165 = vld [vmem:[%s156 + $0x1dd0] sm:$0xff]
        %v1166 = vld [vmem:[%s156 + $0x1dd8] sm:$0xff]
        %v1167 = vld [vmem:[%s156 + $0x1de0] sm:$0xff]
        %v1168 = vld [vmem:[%s156 + $0x1de8] sm:$0xff]
        %v1169 = vld [vmem:[%s156 + $0x1df0] sm:$0xff]
        %v1170 = vld [vmem:[%s156 + $0x1df8] sm:$0xff]
        %v1171 = vld [vmem:[%s156 + $0x1e00] sm:$0xff]
        %v1172 = vld [vmem:[%s156 + $0x1e08] sm:$0xff]
        %v1173 = vld [vmem:[%s156 + $0x1e10] sm:$0xff]
        %v1174 = vld [vmem:[%s156 + $0x1e18] sm:$0xff]
        %v1175 = vld [vmem:[%s156 + $0x1e20] sm:$0xff]
        %v1176 = vld [vmem:[%s156 + $0x1e28] sm:$0xff]
        %v1177 = vld [vmem:[%s156 + $0x1e30] sm:$0xff]
        %v1178 = vld [vmem:[%s156 + $0x1e38] sm:$0xff]
        %v1179 = vld [vmem:[%s156 + $0x1e40] sm:$0xff]
        %v1180 = vld [vmem:[%s156 + $0x1e48] sm:$0xff]
        %v1181 = vld [vmem:[%s156 + $0x1e50] sm:$0xff]
        %v1182 = vld [vmem:[%s156 + $0x1e58] sm:$0xff]
        %v1183 = vld [vmem:[%s156 + $0x1e60] sm:$0xff]
        %v1184 = vld [vmem:[%s156 + $0x1e68] sm:$0xff]
        %v1185 = vld [vmem:[%s156 + $0x1e70] sm:$0xff]
        %v1186 = vld [vmem:[%s156 + $0x1e78] sm:$0xff]
        %v1187 = vld [vmem:[%s156 + $0x1e80] sm:$0xff]
        %v1188 = vld [vmem:[%s156 + $0x1e88] sm:$0xff]
        %v1189 = vld [vmem:[%s156 + $0x1e90] sm:$0xff]
        %v1190 = vld [vmem:[%s156 + $0x1e98] sm:$0xff]
        %v1191 = vld [vmem:[%s156 + $0x1ea0] sm:$0xff]
        %v1192 = vld [vmem:[%s156 + $0x1ea8] sm:$0xff]
        %v1193 = vld [vmem:[%s156 + $0x1eb0] sm:$0xff]
        %v1194 = vld [vmem:[%s156 + $0x1eb8] sm:$0xff]
        %v1195 = vld [vmem:[%s156 + $0x1ec0] sm:$0xff]
        %v1196 = vld [vmem:[%s156 + $0x1ec8] sm:$0xff]
        %v1197 = vld [vmem:[%s156 + $0x1ed0] sm:$0xff]
        %v1198 = vld [vmem:[%s156 + $0x1ed8] sm:$0xff]
        %v1199 = vld [vmem:[%s156 + $0x1ee0] sm:$0xff]
        %v1200 = vld [vmem:[%s156 + $0x1ee8] sm:$0xff]
        %v1201 = vld [vmem:[%s156 + $0x1ef0] sm:$0xff]
        %v1202 = vld [vmem:[%s156 + $0x1ef8] sm:$0xff]
        %v1203 = vld [vmem:[%s156 + $0x1f00] sm:$0xff]
        %v1204 = vld [vmem:[%s156 + $0x1f08] sm:$0xff]
        %v1205 = vld [vmem:[%s156 + $0x1f10] sm:$0xff]
        %v1206 = vld [vmem:[%s156 + $0x1f18] sm:$0xff]
        %v1207 = vld [vmem:[%s156 + $0x1f20] sm:$0xff]
        %v1208 = vld [vmem:[%s156 + $0x1f28] sm:$0xff]
        %v1209 = vld [vmem:[%s156 + $0x1f30] sm:$0xff]
        %v1210 = vld [vmem:[%s156 + $0x1f38] sm:$0xff]
        %v1211 = vld [vmem:[%s156 + $0x1f40] sm:$0xff]
        %v1212 = vld [vmem:[%s156 + $0x1f48] sm:$0xff]
        %v1213 = vld [vmem:[%s156 + $0x1f50] sm:$0xff]
        %v1214 = vld [vmem:[%s156 + $0x1f58] sm:$0xff]
        %v1215 = vld [vmem:[%s156 + $0x1f60] sm:$0xff]
        %v1216 = vld [vmem:[%s156 + $0x1f68] sm:$0xff]
        %v1217 = vld [vmem:[%s156 + $0x1f70] sm:$0xff]
        %v1218 = vld [vmem:[%s156 + $0x1f78] sm:$0xff]
        %v1219 = vld [vmem:[%s156 + $0x1f80] sm:$0xff]
        %v1220 = vld [vmem:[%s156 + $0x1f88] sm:$0xff]
        %v1221 = vld [vmem:[%s156 + $0x1f90] sm:$0xff]
        %v1222 = vld [vmem:[%s156 + $0x1f98] sm:$0xff]
        %v1223 = vld [vmem:[%s156 + $0x1fa0] sm:$0xff]
        %v1224 = vld [vmem:[%s156 + $0x1fa8] sm:$0xff]
        %v1225 = vld [vmem:[%s156 + $0x1fb0] sm:$0xff]
        %v1226 = vld [vmem:[%s156 + $0x1fb8] sm:$0xff]
        %v1227 = vld [vmem:[%s156 + $0x1fc0] sm:$0xff]
        %v1228 = vld [vmem:[%s156 + $0x1fc8] sm:$0xff]
        %v1229 = vld [vmem:[%s156 + $0x1fd0] sm:$0xff]
        %v1230 = vld [vmem:[%s156 + $0x1fd8] sm:$0xff]
        %v1231 = vld [vmem:[%s156 + $0x1fe0] sm:$0xff]
        %v1232 = vld [vmem:[%s156 + $0x1fe8] sm:$0xff]
        %v1233 = vld [vmem:[%s156 + $0x1ff0] sm:$0xff]
        %v1234 = vld [vmem:[%s156 + $0x1ff8] sm:$0xff]
        %1235 = vmatprep.subr.mxu0 %v212
        %1236 = vmatpush1.msra.mxu0 %v211
        %1237 = vmatprep.subr.mxu0 %v216
        %1238 = vmatpush1.msra.mxu0 %v215
        %1239 = vmatprep.subr.mxu0 %v220
        %1240 = vmatpush1.msra.mxu0 %v219
        %1241 = vmatprep.subr.mxu0 %v224
        %1242 = vmatpush1.msra.mxu0 %v223
        %1243 = vmatprep.subr.mxu0 %v228
        %1244 = vmatpush1.msra.mxu0 %v227
        %1245 = vmatprep.subr.mxu0 %v232
        %1246 = vmatpush1.msra.mxu0 %v231
        %1247 = vmatprep.subr.mxu0 %v236
        %1248 = vmatpush1.msra.mxu0 %v235
        %1249 = vmatprep.subr.mxu0 %v240
        %1250 = vmatpush1.msra.mxu0 %v239
        %1251 = vmatprep.subr.mxu0 %v244
        %1252 = vmatpush1.msra.mxu0 %v243
        %1253 = vmatprep.subr.mxu0 %v248
        %1254 = vmatpush1.msra.mxu0 %v247
        %1255 = vmatprep.subr.mxu0 %v252
        %1256 = vmatpush1.msra.mxu0 %v251
        %1257 = vmatprep.subr.mxu0 %v256
        %1258 = vmatpush1.msra.mxu0 %v255
        %1259 = vmatprep.subr.mxu0 %v260
        %1260 = vmatpush1.msra.mxu0 %v259
        %1261 = vmatprep.subr.mxu0 %v264
        %1262 = vmatpush1.msra.mxu0 %v263
        %1263 = vmatprep.subr.mxu0 %v268
        %1264 = vmatpush1.msra.mxu0 %v267
        %1265 = vmatprep.subr.mxu0 %v272
        %1266 = vmatpush1.msra.mxu0 %v271
        %1267 = vmatprep.subr.mxu0 %v276
        %1268 = vmatpush1.msra.mxu0 %v275
        %1269 = vmatprep.subr.mxu0 %v280
        %1270 = vmatpush1.msra.mxu0 %v279
        %1271 = vmatprep.subr.mxu0 %v284
        %1272 = vmatpush1.msra.mxu0 %v283
        %1273 = vmatprep.subr.mxu0 %v288
        %1274 = vmatpush1.msra.mxu0 %v287
        %1275 = vmatprep.subr.mxu0 %v292
        %1276 = vmatpush1.msra.mxu0 %v291
        %1277 = vmatprep.subr.mxu0 %v296
        %1278 = vmatpush1.msra.mxu0 %v295
        %1279 = vmatprep.subr.mxu0 %v300
        %1280 = vmatpush1.msra.mxu0 %v299
        %1281 = vmatprep.subr.mxu0 %v304
        %1282 = vmatpush1.msra.mxu0 %v303
        %1283 = vmatprep.subr.mxu0 %v308
        %1284 = vmatpush1.msra.mxu0 %v307
        %1285 = vmatprep.subr.mxu0 %v312
        %1286 = vmatpush1.msra.mxu0 %v311
        %1287 = vmatprep.subr.mxu0 %v316
        %1288 = vmatpush1.msra.mxu0 %v315
        %1289 = vmatprep.subr.mxu0 %v320
        %1290 = vmatpush1.msra.mxu0 %v319
        %1291 = vmatprep.subr.mxu0 %v324
        %1292 = vmatpush1.msra.mxu0 %v323
        %1293 = vmatprep.subr.mxu0 %v328
        %1294 = vmatpush1.msra.mxu0 %v327
        %1295 = vmatprep.subr.mxu0 %v332
        %1296 = vmatpush1.msra.mxu0 %v331
        %1297 = vmatprep.subr.mxu0 %v336
        %1298 = vmatpush1.msra.mxu0 %v335
        %1299 = vmatprep.mubr.f32.mxu0 %v180
        %1300 = vmatmul.mubr.f32.gmra.mrb[0].mxu0 %v179
        %v1301 = vpop.f32.mrb[0].mxu0
        %v1302 = vadd.f32 0.0, %v1301
        %v1303 = vpop.f32.mrb[0].mxu0
        %v1304 = vadd.f32 0.0, %v1303
        %1305 = vmatprep.mubr.f32.mxu0 %v196
        %1306 = vmatmul.mubr.f32.gmra.mrb[0].mxu0 %v195
        %v1307 = vpop.f32.mrb[0].mxu0
        %v1308 = vadd.f32 0.0, %v1307
        %v1309 = vpop.f32.mrb[0].mxu0
        %v1310 = vadd.f32 0.0, %v1309
        %1311 = vdwg.mxu0
        %1312 = vmatprep.subr.mxu0 %v340
        %1313 = vmatpush1.msra.mxu0 %v339
        %1314 = vmatprep.subr.mxu0 %v344
        %1315 = vmatpush1.msra.mxu0 %v343
        %1316 = vmatprep.subr.mxu0 %v348
        %1317 = vmatpush1.msra.mxu0 %v347
        %1318 = vmatprep.subr.mxu0 %v352
        %1319 = vmatpush1.msra.mxu0 %v351
        %1320 = vmatprep.subr.mxu0 %v356
        %1321 = vmatpush1.msra.mxu0 %v355
        %1322 = vmatprep.subr.mxu0 %v360
        %1323 = vmatpush1.msra.mxu0 %v359
        %1324 = vmatprep.subr.mxu0 %v364
        %1325 = vmatpush1.msra.mxu0 %v363
        %1326 = vmatprep.subr.mxu0 %v368
        %1327 = vmatpush1.msra.mxu0 %v367
        %1328 = vmatprep.subr.mxu0 %v372
        %1329 = vmatpush1.msra.mxu0 %v371
        %1330 = vmatprep.subr.mxu0 %v376
        %1331 = vmatpush1.msra.mxu0 %v375
        %1332 = vmatprep.subr.mxu0 %v380
        %1333 = vmatpush1.msra.mxu0 %v379
        %1334 = vmatprep.subr.mxu0 %v384
        %1335 = vmatpush1.msra.mxu0 %v383
        %1336 = vmatprep.subr.mxu0 %v388
        %1337 = vmatpush1.msra.mxu0 %v387
        %1338 = vmatprep.subr.mxu0 %v392
        %1339 = vmatpush1.msra.mxu0 %v391
        %1340 = vmatprep.subr.mxu0 %v396
        %1341 = vmatpush1.msra.mxu0 %v395
        %1342 = vmatprep.subr.mxu0 %v400
        %1343 = vmatpush1.msra.mxu0 %v399
        %1344 = vmatprep.subr.mxu0 %v404
        %1345 = vmatpush1.msra.mxu0 %v403
        %1346 = vmatprep.subr.mxu0 %v408
        %1347 = vmatpush1.msra.mxu0 %v407
        %1348 = vmatprep.subr.mxu0 %v412
        %1349 = vmatpush1.msra.mxu0 %v411
        %1350 = vmatprep.subr.mxu0 %v416
        %1351 = vmatpush1.msra.mxu0 %v415
        %1352 = vmatprep.subr.mxu0 %v420
        %1353 = vmatpush1.msra.mxu0 %v419
        %1354 = vmatprep.subr.mxu0 %v424
        %1355 = vmatpush1.msra.mxu0 %v423
        %1356 = vmatprep.subr.mxu0 %v428
        %1357 = vmatpush1.msra.mxu0 %v427
        %1358 = vmatprep.subr.mxu0 %v432
        %1359 = vmatpush1.msra.mxu0 %v431
        %1360 = vmatprep.subr.mxu0 %v436
        %1361 = vmatpush1.msra.mxu0 %v435
        %1362 = vmatprep.subr.mxu0 %v440
        %1363 = vmatpush1.msra.mxu0 %v439
        %1364 = vmatprep.subr.mxu0 %v444
        %1365 = vmatpush1.msra.mxu0 %v443
        %1366 = vmatprep.subr.mxu0 %v448
        %1367 = vmatpush1.msra.mxu0 %v447
        %1368 = vmatprep.subr.mxu0 %v452
        %1369 = vmatpush1.msra.mxu0 %v451
        %1370 = vmatprep.subr.mxu0 %v456
        %1371 = vmatpush1.msra.mxu0 %v455
        %1372 = vmatprep.subr.mxu0 %v460
        %1373 = vmatpush1.msra.mxu0 %v459
        %1374 = vmatprep.subr.mxu0 %v464
        %1375 = vmatpush1.msra.mxu0 %v463
        %1376 = vmatprep.mubr.f32.mxu0 %v182
        %1377 = vmatmul.mubr.f32.gmra.mrb[0].mxu0 %v181
        %v1378 = vpop.f32.mrb[0].mxu0
        %v1379 = vadd.f32 %v1302, %v1378
        %v1380 = vpop.f32.mrb[0].mxu0
        %v1381 = vadd.f32 %v1304, %v1380
        %1382 = vmatprep.mubr.f32.mxu0 %v198
        %1383 = vmatmul.mubr.f32.gmra.mrb[0].mxu0 %v197
        %v1384 = vpop.f32.mrb[0].mxu0
        %v1385 = vadd.f32 %v1308, %v1384
        %v1386 = vpop.f32.mrb[0].mxu0
        %v1387 = vadd.f32 %v1310, %v1386
        %1388 = vdwg.mxu0
        %1389 = vmatprep.subr.mxu0 %v468
        %1390 = vmatpush1.msra.mxu0 %v467
        %1391 = vmatprep.subr.mxu0 %v472
        %1392 = vmatpush1.msra.mxu0 %v471
        %1393 = vmatprep.subr.mxu0 %v476
        %1394 = vmatpush1.msra.mxu0 %v475
        %1395 = vmatprep.subr.mxu0 %v480
        %1396 = vmatpush1.msra.mxu0 %v479
        %1397 = vmatprep.subr.mxu0 %v484
        %1398 = vmatpush1.msra.mxu0 %v483
        %1399 = vmatprep.subr.mxu0 %v488
        %1400 = vmatpush1.msra.mxu0 %v487
        %1401 = vmatprep.subr.mxu0 %v492
        %1402 = vmatpush1.msra.mxu0 %v491
        %1403 = vmatprep.subr.mxu0 %v496
        %1404 = vmatpush1.msra.mxu0 %v495
        %1405 = vmatprep.subr.mxu0 %v500
        %1406 = vmatpush1.msra.mxu0 %v499
        %1407 = vmatprep.subr.mxu0 %v504
        %1408 = vmatpush1.msra.mxu0 %v503
        %1409 = vmatprep.subr.mxu0 %v508
        %1410 = vmatpush1.msra.mxu0 %v507
        %1411 = vmatprep.subr.mxu0 %v512
        %1412 = vmatpush1.msra.mxu0 %v511
        %1413 = vmatprep.subr.mxu0 %v516
        %1414 = vmatpush1.msra.mxu0 %v515
        %1415 = vmatprep.subr.mxu0 %v520
        %1416 = vmatpush1.msra.mxu0 %v519
        %1417 = vmatprep.subr.mxu0 %v524
        %1418 = vmatpush1.msra.mxu0 %v523
        %1419 = vmatprep.subr.mxu0 %v528
        %1420 = vmatpush1.msra.mxu0 %v527
        %1421 = vmatprep.subr.mxu0 %v532
        %1422 = vmatpush1.msra.mxu0 %v531
        %1423 = vmatprep.subr.mxu0 %v536
        %1424 = vmatpush1.msra.mxu0 %v535
        %1425 = vmatprep.subr.mxu0 %v540
        %1426 = vmatpush1.msra.mxu0 %v539
        %1427 = vmatprep.subr.mxu0 %v544
        %1428 = vmatpush1.msra.mxu0 %v543
        %1429 = vmatprep.subr.mxu0 %v548
        %1430 = vmatpush1.msra.mxu0 %v547
        %1431 = vmatprep.subr.mxu0 %v552
        %1432 = vmatpush1.msra.mxu0 %v551
        %1433 = vmatprep.subr.mxu0 %v556
        %1434 = vmatpush1.msra.mxu0 %v555
        %1435 = vmatprep.subr.mxu0 %v560
        %1436 = vmatpush1.msra.mxu0 %v559
        %1437 = vmatprep.subr.mxu0 %v564
        %1438 = vmatpush1.msra.mxu0 %v563
        %1439 = vmatprep.subr.mxu0 %v568
        %1440 = vmatpush1.msra.mxu0 %v567
        %1441 = vmatprep.subr.mxu0 %v572
        %1442 = vmatpush1.msra.mxu0 %v571
        %1443 = vmatprep.subr.mxu0 %v576
        %1444 = vmatpush1.msra.mxu0 %v575
        %1445 = vmatprep.subr.mxu0 %v580
        %1446 = vmatpush1.msra.mxu0 %v579
        %1447 = vmatprep.subr.mxu0 %v584
        %1448 = vmatpush1.msra.mxu0 %v583
        %1449 = vmatprep.subr.mxu0 %v588
        %1450 = vmatpush1.msra.mxu0 %v587
        %1451 = vmatprep.subr.mxu0 %v592
        %1452 = vmatpush1.msra.mxu0 %v591
        %1453 = vmatprep.mubr.f32.mxu0 %v184
        %1454 = vmatmul.mubr.f32.gmra.mrb[0].mxu0 %v183
        %v1455 = vpop.f32.mrb[0].mxu0
        %v1456 = vadd.f32 %v1379, %v1455
        %v1457 = vpop.f32.mrb[0].mxu0
        %v1458 = vadd.f32 %v1381, %v1457
        %1459 = vmatprep.mubr.f32.mxu0 %v200
        %1460 = vmatmul.mubr.f32.gmra.mrb[0].mxu0 %v199
        %v1461 = vpop.f32.mrb[0].mxu0
        %v1462 = vadd.f32 %v1385, %v1461
        %v1463 = vpop.f32.mrb[0].mxu0
        %v1464 = vadd.f32 %v1387, %v1463
        %1465 = vdwg.mxu0
        %1466 = vmatprep.subr.mxu0 %v596
        %1467 = vmatpush1.msra.mxu0 %v595
        %1468 = vmatprep.subr.mxu0 %v600
        %1469 = vmatpush1.msra.mxu0 %v599
        %1470 = vmatprep.subr.mxu0 %v604
        %1471 = vmatpush1.msra.mxu0 %v603
        %1472 = vmatprep.subr.mxu0 %v608
        %1473 = vmatpush1.msra.mxu0 %v607
        %1474 = vmatprep.subr.mxu0 %v612
        %1475 = vmatpush1.msra.mxu0 %v611
        %1476 = vmatprep.subr.mxu0 %v616
        %1477 = vmatpush1.msra.mxu0 %v615
        %1478 = vmatprep.subr.mxu0 %v620
        %1479 = vmatpush1.msra.mxu0 %v619
        %1480 = vmatprep.subr.mxu0 %v624
        %1481 = vmatpush1.msra.mxu0 %v623
        %1482 = vmatprep.subr.mxu0 %v628
        %1483 = vmatpush1.msra.mxu0 %v627
        %1484 = vmatprep.subr.mxu0 %v632
        %1485 = vmatpush1.msra.mxu0 %v631
        %1486 = vmatprep.subr.mxu0 %v636
        %1487 = vmatpush1.msra.mxu0 %v635
        %1488 = vmatprep.subr.mxu0 %v640
        %1489 = vmatpush1.msra.mxu0 %v639
        %1490 = vmatprep.subr.mxu0 %v644
        %1491 = vmatpush1.msra.mxu0 %v643
        %1492 = vmatprep.subr.mxu0 %v648
        %1493 = vmatpush1.msra.mxu0 %v647
        %1494 = vmatprep.subr.mxu0 %v652
        %1495 = vmatpush1.msra.mxu0 %v651
        %1496 = vmatprep.subr.mxu0 %v656
        %1497 = vmatpush1.msra.mxu0 %v655
        %1498 = vmatprep.subr.mxu0 %v660
        %1499 = vmatpush1.msra.mxu0 %v659
        %1500 = vmatprep.subr.mxu0 %v664
        %1501 = vmatpush1.msra.mxu0 %v663
        %1502 = vmatprep.subr.mxu0 %v668
        %1503 = vmatpush1.msra.mxu0 %v667
        %1504 = vmatprep.subr.mxu0 %v672
        %1505 = vmatpush1.msra.mxu0 %v671
        %1506 = vmatprep.subr.mxu0 %v676
        %1507 = vmatpush1.msra.mxu0 %v675
        %1508 = vmatprep.subr.mxu0 %v680
        %1509 = vmatpush1.msra.mxu0 %v679
        %1510 = vmatprep.subr.mxu0 %v684
        %1511 = vmatpush1.msra.mxu0 %v683
        %1512 = vmatprep.subr.mxu0 %v688
        %1513 = vmatpush1.msra.mxu0 %v687
        %1514 = vmatprep.subr.mxu0 %v692
        %1515 = vmatpush1.msra.mxu0 %v691
        %1516 = vmatprep.subr.mxu0 %v696
        %1517 = vmatpush1.msra.mxu0 %v695
        %1518 = vmatprep.subr.mxu0 %v700
        %1519 = vmatpush1.msra.mxu0 %v699
        %1520 = vmatprep.subr.mxu0 %v704
        %1521 = vmatpush1.msra.mxu0 %v703
        %1522 = vmatprep.subr.mxu0 %v708
        %1523 = vmatpush1.msra.mxu0 %v707
        %1524 = vmatprep.subr.mxu0 %v712
        %1525 = vmatpush1.msra.mxu0 %v711
        %1526 = vmatprep.subr.mxu0 %v716
        %1527 = vmatpush1.msra.mxu0 %v715
        %1528 = vmatprep.subr.mxu0 %v720
        %1529 = vmatpush1.msra.mxu0 %v719
        %1530 = vmatprep.mubr.f32.mxu0 %v186
        %1531 = vmatmul.mubr.f32.gmra.mrb[0].mxu0 %v185
        %v1532 = vpop.f32.mrb[0].mxu0
        %v1533 = vadd.f32 %v1456, %v1532
        %v1534 = vpop.f32.mrb[0].mxu0
        %v1535 = vadd.f32 %v1458, %v1534
        %1536 = vmatprep.mubr.f32.mxu0 %v202
        %1537 = vmatmul.mubr.f32.gmra.mrb[0].mxu0 %v201
        %v1538 = vpop.f32.mrb[0].mxu0
        %v1539 = vadd.f32 %v1462, %v1538
        %v1540 = vpop.f32.mrb[0].mxu0
        %v1541 = vadd.f32 %v1464, %v1540
        %1542 = vdwg.mxu0
        %1543 = vmatprep.subr.mxu0 %v724
        %1544 = vmatpush1.msra.mxu0 %v723
        %1545 = vmatprep.subr.mxu0 %v728
        %1546 = vmatpush1.msra.mxu0 %v727
        %1547 = vmatprep.subr.mxu0 %v732
        %1548 = vmatpush1.msra.mxu0 %v731
        %1549 = vmatprep.subr.mxu0 %v736
        %1550 = vmatpush1.msra.mxu0 %v735
        %1551 = vmatprep.subr.mxu0 %v740
        %1552 = vmatpush1.msra.mxu0 %v739
        %1553 = vmatprep.subr.mxu0 %v744
        %1554 = vmatpush1.msra.mxu0 %v743
        %1555 = vmatprep.subr.mxu0 %v748
        %1556 = vmatpush1.msra.mxu0 %v747
        %1557 = vmatprep.subr.mxu0 %v752
        %1558 = vmatpush1.msra.mxu0 %v751
        %1559 = vmatprep.subr.mxu0 %v756
        %1560 = vmatpush1.msra.mxu0 %v755
        %1561 = vmatprep.subr.mxu0 %v760
        %1562 = vmatpush1.msra.mxu0 %v759
        %1563 = vmatprep.subr.mxu0 %v764
        %1564 = vmatpush1.msra.mxu0 %v763
        %1565 = vmatprep.subr.mxu0 %v768
        %1566 = vmatpush1.msra.mxu0 %v767
        %1567 = vmatprep.subr.mxu0 %v772
        %1568 = vmatpush1.msra.mxu0 %v771
        %1569 = vmatprep.subr.mxu0 %v776
        %1570 = vmatpush1.msra.mxu0 %v775
        %1571 = vmatprep.subr.mxu0 %v780
        %1572 = vmatpush1.msra.mxu0 %v779
        %1573 = vmatprep.subr.mxu0 %v784
        %1574 = vmatpush1.msra.mxu0 %v783
        %1575 = vmatprep.subr.mxu0 %v788
        %1576 = vmatpush1.msra.mxu0 %v787
        %1577 = vmatprep.subr.mxu0 %v792
        %1578 = vmatpush1.msra.mxu0 %v791
        %1579 = vmatprep.subr.mxu0 %v796
        %1580 = vmatpush1.msra.mxu0 %v795
        %1581 = vmatprep.subr.mxu0 %v800
        %1582 = vmatpush1.msra.mxu0 %v799
        %1583 = vmatprep.subr.mxu0 %v804
        %1584 = vmatpush1.msra.mxu0 %v803
        %1585 = vmatprep.subr.mxu0 %v808
        %1586 = vmatpush1.msra.mxu0 %v807
        %1587 = vmatprep.subr.mxu0 %v812
        %1588 = vmatpush1.msra.mxu0 %v811
        %1589 = vmatprep.subr.mxu0 %v816
        %1590 = vmatpush1.msra.mxu0 %v815
        %1591 = vmatprep.subr.mxu0 %v820
        %1592 = vmatpush1.msra.mxu0 %v819
        %1593 = vmatprep.subr.mxu0 %v824
        %1594 = vmatpush1.msra.mxu0 %v823
        %1595 = vmatprep.subr.mxu0 %v828
        %1596 = vmatpush1.msra.mxu0 %v827
        %1597 = vmatprep.subr.mxu0 %v832
        %1598 = vmatpush1.msra.mxu0 %v831
        %1599 = vmatprep.subr.mxu0 %v836
        %1600 = vmatpush1.msra.mxu0 %v835
        %1601 = vmatprep.subr.mxu0 %v840
        %1602 = vmatpush1.msra.mxu0 %v839
        %1603 = vmatprep.subr.mxu0 %v844
        %1604 = vmatpush1.msra.mxu0 %v843
        %1605 = vmatprep.subr.mxu0 %v848
        %1606 = vmatpush1.msra.mxu0 %v847
        %1607 = vmatprep.mubr.f32.mxu0 %v188
        %1608 = vmatmul.mubr.f32.gmra.mrb[0].mxu0 %v187
        %v1609 = vpop.f32.mrb[0].mxu0
        %v1610 = vadd.f32 %v1533, %v1609
        %v1611 = vpop.f32.mrb[0].mxu0
        %v1612 = vadd.f32 %v1535, %v1611
        %1613 = vmatprep.mubr.f32.mxu0 %v204
        %1614 = vmatmul.mubr.f32.gmra.mrb[0].mxu0 %v203
        %v1615 = vpop.f32.mrb[0].mxu0
        %v1616 = vadd.f32 %v1539, %v1615
        %v1617 = vpop.f32.mrb[0].mxu0
        %v1618 = vadd.f32 %v1541, %v1617
        %1619 = vdwg.mxu0
        %1620 = vmatprep.subr.mxu0 %v852
        %1621 = vmatpush1.msra.mxu0 %v851
        %1622 = vmatprep.subr.mxu0 %v856
        %1623 = vmatpush1.msra.mxu0 %v855
        %1624 = vmatprep.subr.mxu0 %v860
        %1625 = vmatpush1.msra.mxu0 %v859
        %1626 = vmatprep.subr.mxu0 %v864
        %1627 = vmatpush1.msra.mxu0 %v863
        %1628 = vmatprep.subr.mxu0 %v868
        %1629 = vmatpush1.msra.mxu0 %v867
        %1630 = vmatprep.subr.mxu0 %v872
        %1631 = vmatpush1.msra.mxu0 %v871
        %1632 = vmatprep.subr.mxu0 %v876
        %1633 = vmatpush1.msra.mxu0 %v875
        %1634 = vmatprep.subr.mxu0 %v880
        %1635 = vmatpush1.msra.mxu0 %v879
        %1636 = vmatprep.subr.mxu0 %v884
        %1637 = vmatpush1.msra.mxu0 %v883
        %1638 = vmatprep.subr.mxu0 %v888
        %1639 = vmatpush1.msra.mxu0 %v887
        %1640 = vmatprep.subr.mxu0 %v892
        %1641 = vmatpush1.msra.mxu0 %v891
        %1642 = vmatprep.subr.mxu0 %v896
        %1643 = vmatpush1.msra.mxu0 %v895
        %1644 = vmatprep.subr.mxu0 %v900
        %1645 = vmatpush1.msra.mxu0 %v899
        %1646 = vmatprep.subr.mxu0 %v904
        %1647 = vmatpush1.msra.mxu0 %v903
        %1648 = vmatprep.subr.mxu0 %v908
        %1649 = vmatpush1.msra.mxu0 %v907
        %1650 = vmatprep.subr.mxu0 %v912
        %1651 = vmatpush1.msra.mxu0 %v911
        %1652 = vmatprep.subr.mxu0 %v916
        %1653 = vmatpush1.msra.mxu0 %v915
        %1654 = vmatprep.subr.mxu0 %v920
        %1655 = vmatpush1.msra.mxu0 %v919
        %1656 = vmatprep.subr.mxu0 %v924
        %1657 = vmatpush1.msra.mxu0 %v923
        %1658 = vmatprep.subr.mxu0 %v928
        %1659 = vmatpush1.msra.mxu0 %v927
        %1660 = vmatprep.subr.mxu0 %v932
        %1661 = vmatpush1.msra.mxu0 %v931
        %1662 = vmatprep.subr.mxu0 %v936
        %1663 = vmatpush1.msra.mxu0 %v935
        %1664 = vmatprep.subr.mxu0 %v940
        %1665 = vmatpush1.msra.mxu0 %v939
        %1666 = vmatprep.subr.mxu0 %v944
        %1667 = vmatpush1.msra.mxu0 %v943
        %1668 = vmatprep.subr.mxu0 %v948
        %1669 = vmatpush1.msra.mxu0 %v947
        %1670 = vmatprep.subr.mxu0 %v952
        %1671 = vmatpush1.msra.mxu0 %v951
        %1672 = vmatprep.subr.mxu0 %v956
        %1673 = vmatpush1.msra.mxu0 %v955
        %1674 = vmatprep.subr.mxu0 %v960
        %1675 = vmatpush1.msra.mxu0 %v959
        %1676 = vmatprep.subr.mxu0 %v964
        %1677 = vmatpush1.msra.mxu0 %v963
        %1678 = vmatprep.subr.mxu0 %v968
        %1679 = vmatpush1.msra.mxu0 %v967
        %1680 = vmatprep.subr.mxu0 %v972
        %1681 = vmatpush1.msra.mxu0 %v971
        %1682 = vmatprep.subr.mxu0 %v976
        %1683 = vmatpush1.msra.mxu0 %v975
        %1684 = vmatprep.mubr.f32.mxu0 %v190
        %1685 = vmatmul.mubr.f32.gmra.mrb[0].mxu0 %v189
        %v1686 = vpop.f32.mrb[0].mxu0
        %v1687 = vadd.f32 %v1610, %v1686
        %v1688 = vpop.f32.mrb[0].mxu0
        %v1689 = vadd.f32 %v1612, %v1688
        %1690 = vmatprep.mubr.f32.mxu0 %v206
        %1691 = vmatmul.mubr.f32.gmra.mrb[0].mxu0 %v205
        %v1692 = vpop.f32.mrb[0].mxu0
        %v1693 = vadd.f32 %v1616, %v1692
        %v1694 = vpop.f32.mrb[0].mxu0
        %v1695 = vadd.f32 %v1618, %v1694
        %1696 = vdwg.mxu0
        %1697 = vmatprep.subr.mxu0 %v980
        %1698 = vmatpush1.msra.mxu0 %v979
        %1699 = vmatprep.subr.mxu0 %v984
        %1700 = vmatpush1.msra.mxu0 %v983
        %1701 = vmatprep.subr.mxu0 %v988
        %1702 = vmatpush1.msra.mxu0 %v987
        %1703 = vmatprep.subr.mxu0 %v992
        %1704 = vmatpush1.msra.mxu0 %v991
        %1705 = vmatprep.subr.mxu0 %v996
        %1706 = vmatpush1.msra.mxu0 %v995
        %1707 = vmatprep.subr.mxu0 %v1000
        %1708 = vmatpush1.msra.mxu0 %v999
        %1709 = vmatprep.subr.mxu0 %v1004
        %1710 = vmatpush1.msra.mxu0 %v1003
        %1711 = vmatprep.subr.mxu0 %v1008
        %1712 = vmatpush1.msra.mxu0 %v1007
        %1713 = vmatprep.subr.mxu0 %v1012
        %1714 = vmatpush1.msra.mxu0 %v1011
        %1715 = vmatprep.subr.mxu0 %v1016
        %1716 = vmatpush1.msra.mxu0 %v1015
        %1717 = vmatprep.subr.mxu0 %v1020
        %1718 = vmatpush1.msra.mxu0 %v1019
        %1719 = vmatprep.subr.mxu0 %v1024
        %1720 = vmatpush1.msra.mxu0 %v1023
        %1721 = vmatprep.subr.mxu0 %v1028
        %1722 = vmatpush1.msra.mxu0 %v1027
        %1723 = vmatprep.subr.mxu0 %v1032
        %1724 = vmatpush1.msra.mxu0 %v1031
        %1725 = vmatprep.subr.mxu0 %v1036
        %1726 = vmatpush1.msra.mxu0 %v1035
        %1727 = vmatprep.subr.mxu0 %v1040
        %1728 = vmatpush1.msra.mxu0 %v1039
        %1729 = vmatprep.subr.mxu0 %v1044
        %1730 = vmatpush1.msra.mxu0 %v1043
        %1731 = vmatprep.subr.mxu0 %v1048
        %1732 = vmatpush1.msra.mxu0 %v1047
        %1733 = vmatprep.subr.mxu0 %v1052
        %1734 = vmatpush1.msra.mxu0 %v1051
        %1735 = vmatprep.subr.mxu0 %v1056
        %1736 = vmatpush1.msra.mxu0 %v1055
        %1737 = vmatprep.subr.mxu0 %v1060
        %1738 = vmatpush1.msra.mxu0 %v1059
        %1739 = vmatprep.subr.mxu0 %v1064
        %1740 = vmatpush1.msra.mxu0 %v1063
        %1741 = vmatprep.subr.mxu0 %v1068
        %1742 = vmatpush1.msra.mxu0 %v1067
        %1743 = vmatprep.subr.mxu0 %v1072
        %1744 = vmatpush1.msra.mxu0 %v1071
        %1745 = vmatprep.subr.mxu0 %v1076
        %1746 = vmatpush1.msra.mxu0 %v1075
        %1747 = vmatprep.subr.mxu0 %v1080
        %1748 = vmatpush1.msra.mxu0 %v1079
        %1749 = vmatprep.subr.mxu0 %v1084
        %1750 = vmatpush1.msra.mxu0 %v1083
        %1751 = vmatprep.subr.mxu0 %v1088
        %1752 = vmatpush1.msra.mxu0 %v1087
        %1753 = vmatprep.subr.mxu0 %v1092
        %1754 = vmatpush1.msra.mxu0 %v1091
        %1755 = vmatprep.subr.mxu0 %v1096
        %1756 = vmatpush1.msra.mxu0 %v1095
        %1757 = vmatprep.subr.mxu0 %v1100
        %1758 = vmatpush1.msra.mxu0 %v1099
        %1759 = vmatprep.subr.mxu0 %v1104
        %1760 = vmatpush1.msra.mxu0 %v1103
        %1761 = vmatprep.mubr.f32.mxu0 %v192
        %1762 = vmatmul.mubr.f32.gmra.mrb[0].mxu0 %v191
        %v1763 = vpop.f32.mrb[0].mxu0
        %v1764 = vadd.f32 %v1687, %v1763
        %v1765 = vpop.f32.mrb[0].mxu0
        %v1766 = vadd.f32 %v1689, %v1765
        %1767 = vmatprep.mubr.f32.mxu0 %v208
        %1768 = vmatmul.mubr.f32.gmra.mrb[0].mxu0 %v207
        %v1769 = vpop.f32.mrb[0].mxu0
        %v1770 = vadd.f32 %v1693, %v1769
        %v1771 = vpop.f32.mrb[0].mxu0
        %v1772 = vadd.f32 %v1695, %v1771
        %1773 = vdwg.mxu0
        %1774 = vmatprep.subr.mxu0 %v1108
        %1775 = vmatpush1.msra.mxu0 %v1107
        %1776 = vmatprep.subr.mxu0 %v1112
        %1777 = vmatpush1.msra.mxu0 %v1111
        %1778 = vmatprep.subr.mxu0 %v1116
        %1779 = vmatpush1.msra.mxu0 %v1115
        %1780 = vmatprep.subr.mxu0 %v1120
        %1781 = vmatpush1.msra.mxu0 %v1119
        %1782 = vmatprep.subr.mxu0 %v1124
        %1783 = vmatpush1.msra.mxu0 %v1123
        %1784 = vmatprep.subr.mxu0 %v1128
        %1785 = vmatpush1.msra.mxu0 %v1127
        %1786 = vmatprep.subr.mxu0 %v1132
        %1787 = vmatpush1.msra.mxu0 %v1131
        %1788 = vmatprep.subr.mxu0 %v1136
        %1789 = vmatpush1.msra.mxu0 %v1135
        %1790 = vmatprep.subr.mxu0 %v1140
        %1791 = vmatpush1.msra.mxu0 %v1139
        %1792 = vmatprep.subr.mxu0 %v1144
        %1793 = vmatpush1.msra.mxu0 %v1143
        %1794 = vmatprep.subr.mxu0 %v1148
        %1795 = vmatpush1.msra.mxu0 %v1147
        %1796 = vmatprep.subr.mxu0 %v1152
        %1797 = vmatpush1.msra.mxu0 %v1151
        %1798 = vmatprep.subr.mxu0 %v1156
        %1799 = vmatpush1.msra.mxu0 %v1155
        %1800 = vmatprep.subr.mxu0 %v1160
        %1801 = vmatpush1.msra.mxu0 %v1159
        %1802 = vmatprep.subr.mxu0 %v1164
        %1803 = vmatpush1.msra.mxu0 %v1163
        %1804 = vmatprep.subr.mxu0 %v1168
        %1805 = vmatpush1.msra.mxu0 %v1167
        %1806 = vmatprep.subr.mxu0 %v1172
        %1807 = vmatpush1.msra.mxu0 %v1171
        %1808 = vmatprep.subr.mxu0 %v1176
        %1809 = vmatpush1.msra.mxu0 %v1175
        %1810 = vmatprep.subr.mxu0 %v1180
        %1811 = vmatpush1.msra.mxu0 %v1179
        %1812 = vmatprep.subr.mxu0 %v1184
        %1813 = vmatpush1.msra.mxu0 %v1183
        %1814 = vmatprep.subr.mxu0 %v1188
        %1815 = vmatpush1.msra.mxu0 %v1187
        %1816 = vmatprep.subr.mxu0 %v1192
        %1817 = vmatpush1.msra.mxu0 %v1191
        %1818 = vmatprep.subr.mxu0 %v1196
        %1819 = vmatpush1.msra.mxu0 %v1195
        %1820 = vmatprep.subr.mxu0 %v1200
        %1821 = vmatpush1.msra.mxu0 %v1199
        %1822 = vmatprep.subr.mxu0 %v1204
        %1823 = vmatpush1.msra.mxu0 %v1203
        %1824 = vmatprep.subr.mxu0 %v1208
        %1825 = vmatpush1.msra.mxu0 %v1207
        %1826 = vmatprep.subr.mxu0 %v1212
        %1827 = vmatpush1.msra.mxu0 %v1211
        %1828 = vmatprep.subr.mxu0 %v1216
        %1829 = vmatpush1.msra.mxu0 %v1215
        %1830 = vmatprep.subr.mxu0 %v1220
        %1831 = vmatpush1.msra.mxu0 %v1219
        %1832 = vmatprep.subr.mxu0 %v1224
        %1833 = vmatpush1.msra.mxu0 %v1223
        %1834 = vmatprep.subr.mxu0 %v1228
        %1835 = vmatpush1.msra.mxu0 %v1227
        %1836 = vmatprep.subr.mxu0 %v1232
        %1837 = vmatpush1.msra.mxu0 %v1231
        %1838 = vmatprep.mubr.f32.mxu0 %v194
        %1839 = vmatmul.mubr.f32.gmra.mrb[0].mxu0 %v193
        %v1840 = vpop.f32.mrb[0].mxu0
        %v1841 = vadd.f32 %v1764, %v1840
        %v1842 = vpop.f32.mrb[0].mxu0
        %v1843 = vadd.f32 %v1766, %v1842
        %1844 = vmatprep.mubr.f32.mxu0 %v210
        %1845 = vmatmul.mubr.f32.gmra.mrb[0].mxu0 %v209
        %v1846 = vpop.f32.mrb[0].mxu0
        %v1847 = vadd.f32 %v1770, %v1846
        %v1848 = vpop.f32.mrb[0].mxu0
        %v1849 = vadd.f32 %v1772, %v1848
        %1850 = vdwg.mxu0
        %1851 = vmatprep.subr.mxu0 %v214
        %1852 = vmatpush1.msra.mxu0 %v213
        %1853 = vmatprep.subr.mxu0 %v218
        %1854 = vmatpush1.msra.mxu0 %v217
        %1855 = vmatprep.subr.mxu0 %v222
        %1856 = vmatpush1.msra.mxu0 %v221
        %1857 = vmatprep.subr.mxu0 %v226
        %1858 = vmatpush1.msra.mxu0 %v225
        %1859 = vmatprep.subr.mxu0 %v230
        %1860 = vmatpush1.msra.mxu0 %v229
        %1861 = vmatprep.subr.mxu0 %v234
        %1862 = vmatpush1.msra.mxu0 %v233
        %1863 = vmatprep.subr.mxu0 %v238
        %1864 = vmatpush1.msra.mxu0 %v237
        %1865 = vmatprep.subr.mxu0 %v242
        %1866 = vmatpush1.msra.mxu0 %v241
        %1867 = vmatprep.subr.mxu0 %v246
        %1868 = vmatpush1.msra.mxu0 %v245
        %1869 = vmatprep.subr.mxu0 %v250
        %1870 = vmatpush1.msra.mxu0 %v249
        %1871 = vmatprep.subr.mxu0 %v254
        %1872 = vmatpush1.msra.mxu0 %v253
        %1873 = vmatprep.subr.mxu0 %v258
        %1874 = vmatpush1.msra.mxu0 %v257
        %1875 = vmatprep.subr.mxu0 %v262
        %1876 = vmatpush1.msra.mxu0 %v261
        %1877 = vmatprep.subr.mxu0 %v266
        %1878 = vmatpush1.msra.mxu0 %v265
        %1879 = vmatprep.subr.mxu0 %v270
        %1880 = vmatpush1.msra.mxu0 %v269
        %1881 = vmatprep.subr.mxu0 %v274
        %1882 = vmatpush1.msra.mxu0 %v273
        %1883 = vmatprep.subr.mxu0 %v278
        %1884 = vmatpush1.msra.mxu0 %v277
        %1885 = vmatprep.subr.mxu0 %v282
        %1886 = vmatpush1.msra.mxu0 %v281
        %1887 = vmatprep.subr.mxu0 %v286
        %1888 = vmatpush1.msra.mxu0 %v285
        %1889 = vmatprep.subr.mxu0 %v290
        %1890 = vmatpush1.msra.mxu0 %v289
        %1891 = vmatprep.subr.mxu0 %v294
        %1892 = vmatpush1.msra.mxu0 %v293
        %1893 = vmatprep.subr.mxu0 %v298
        %1894 = vmatpush1.msra.mxu0 %v297
        %1895 = vmatprep.subr.mxu0 %v302
        %1896 = vmatpush1.msra.mxu0 %v301
        %1897 = vmatprep.subr.mxu0 %v306
        %1898 = vmatpush1.msra.mxu0 %v305
        %1899 = vmatprep.subr.mxu0 %v310
        %1900 = vmatpush1.msra.mxu0 %v309
        %1901 = vmatprep.subr.mxu0 %v314
        %1902 = vmatpush1.msra.mxu0 %v313
        %1903 = vmatprep.subr.mxu0 %v318
        %1904 = vmatpush1.msra.mxu0 %v317
        %1905 = vmatprep.subr.mxu0 %v322
        %1906 = vmatpush1.msra.mxu0 %v321
        %1907 = vmatprep.subr.mxu0 %v326
        %1908 = vmatpush1.msra.mxu0 %v325
        %1909 = vmatprep.subr.mxu0 %v330
        %1910 = vmatpush1.msra.mxu0 %v329
        %1911 = vmatprep.subr.mxu0 %v334
        %1912 = vmatpush1.msra.mxu0 %v333
        %1913 = vmatprep.subr.mxu0 %v338
        %1914 = vmatpush1.msra.mxu0 %v337
        %1915 = vmatprep.mubr.f32.mxu0 %v180
        %1916 = vmatmul.mubr.f32.gmra.mrb[0].mxu0 %v179
        %v1917 = vpop.f32.mrb[0].mxu0
        %v1918 = vadd.f32 0.0, %v1917
        %v1919 = vpop.f32.mrb[0].mxu0
        %v1920 = vadd.f32 0.0, %v1919
        %1921 = vmatprep.mubr.f32.mxu0 %v196
        %1922 = vmatmul.mubr.f32.gmra.mrb[0].mxu0 %v195
        %v1923 = vpop.f32.mrb[0].mxu0
        %v1924 = vadd.f32 0.0, %v1923
        %v1925 = vpop.f32.mrb[0].mxu0
        %v1926 = vadd.f32 0.0, %v1925
        %1927 = vdwg.mxu0
        %1928 = vmatprep.subr.mxu0 %v342
        %1929 = vmatpush1.msra.mxu0 %v341
        %1930 = vmatprep.subr.mxu0 %v346
        %1931 = vmatpush1.msra.mxu0 %v345
        %1932 = vmatprep.subr.mxu0 %v350
        %1933 = vmatpush1.msra.mxu0 %v349
        %1934 = vmatprep.subr.mxu0 %v354
        %1935 = vmatpush1.msra.mxu0 %v353
        %1936 = vmatprep.subr.mxu0 %v358
        %1937 = vmatpush1.msra.mxu0 %v357
        %1938 = vmatprep.subr.mxu0 %v362
        %1939 = vmatpush1.msra.mxu0 %v361
        %1940 = vmatprep.subr.mxu0 %v366
        %1941 = vmatpush1.msra.mxu0 %v365
        %1942 = vmatprep.subr.mxu0 %v370
        %1943 = vmatpush1.msra.mxu0 %v369
        %1944 = vmatprep.subr.mxu0 %v374
        %1945 = vmatpush1.msra.mxu0 %v373
        %1946 = vmatprep.subr.mxu0 %v378
        %1947 = vmatpush1.msra.mxu0 %v377
        %1948 = vmatprep.subr.mxu0 %v382
        %1949 = vmatpush1.msra.mxu0 %v381
        %1950 = vmatprep.subr.mxu0 %v386
        %1951 = vmatpush1.msra.mxu0 %v385
        %1952 = vmatprep.subr.mxu0 %v390
        %1953 = vmatpush1.msra.mxu0 %v389
        %1954 = vmatprep.subr.mxu0 %v394
        %1955 = vmatpush1.msra.mxu0 %v393
        %1956 = vmatprep.subr.mxu0 %v398
        %1957 = vmatpush1.msra.mxu0 %v397
        %1958 = vmatprep.subr.mxu0 %v402
        %1959 = vmatpush1.msra.mxu0 %v401
        %1960 = vmatprep.subr.mxu0 %v406
        %1961 = vmatpush1.msra.mxu0 %v405
        %1962 = vmatprep.subr.mxu0 %v410
        %1963 = vmatpush1.msra.mxu0 %v409
        %1964 = vmatprep.subr.mxu0 %v414
        %1965 = vmatpush1.msra.mxu0 %v413
        %1966 = vmatprep.subr.mxu0 %v418
        %1967 = vmatpush1.msra.mxu0 %v417
        %1968 = vmatprep.subr.mxu0 %v422
        %1969 = vmatpush1.msra.mxu0 %v421
        %1970 = vmatprep.subr.mxu0 %v426
        %1971 = vmatpush1.msra.mxu0 %v425
        %1972 = vmatprep.subr.mxu0 %v430
        %1973 = vmatpush1.msra.mxu0 %v429
        %1974 = vmatprep.subr.mxu0 %v434
        %1975 = vmatpush1.msra.mxu0 %v433
        %1976 = vmatprep.subr.mxu0 %v438
        %1977 = vmatpush1.msra.mxu0 %v437
        %1978 = vmatprep.subr.mxu0 %v442
        %1979 = vmatpush1.msra.mxu0 %v441
        %1980 = vmatprep.subr.mxu0 %v446
        %1981 = vmatpush1.msra.mxu0 %v445
        %1982 = vmatprep.subr.mxu0 %v450
        %1983 = vmatpush1.msra.mxu0 %v449
        %1984 = vmatprep.subr.mxu0 %v454
        %1985 = vmatpush1.msra.mxu0 %v453
        %1986 = vmatprep.subr.mxu0 %v458
        %1987 = vmatpush1.msra.mxu0 %v457
        %1988 = vmatprep.subr.mxu0 %v462
        %1989 = vmatpush1.msra.mxu0 %v461
        %1990 = vmatprep.subr.mxu0 %v466
        %1991 = vmatpush1.msra.mxu0 %v465
        %1992 = vmatprep.mubr.f32.mxu0 %v182
        %1993 = vmatmul.mubr.f32.gmra.mrb[0].mxu0 %v181
        %v1994 = vpop.f32.mrb[0].mxu0
        %v1995 = vadd.f32 %v1918, %v1994
        %v1996 = vpop.f32.mrb[0].mxu0
        %v1997 = vadd.f32 %v1920, %v1996
        %1998 = vmatprep.mubr.f32.mxu0 %v198
        %1999 = vmatmul.mubr.f32.gmra.mrb[0].mxu0 %v197
        %v2000 = vpop.f32.mrb[0].mxu0
        %v2001 = vadd.f32 %v1924, %v2000
        %v2002 = vpop.f32.mrb[0].mxu0
        %v2003 = vadd.f32 %v1926, %v2002
        %2004 = vdwg.mxu0
        %2005 = vmatprep.subr.mxu0 %v470
        %2006 = vmatpush1.msra.mxu0 %v469
        %2007 = vmatprep.subr.mxu0 %v474
        %2008 = vmatpush1.msra.mxu0 %v473
        %2009 = vmatprep.subr.mxu0 %v478
        %2010 = vmatpush1.msra.mxu0 %v477
        %2011 = vmatprep.subr.mxu0 %v482
        %2012 = vmatpush1.msra.mxu0 %v481
        %2013 = vmatprep.subr.mxu0 %v486
        %2014 = vmatpush1.msra.mxu0 %v485
        %2015 = vmatprep.subr.mxu0 %v490
        %2016 = vmatpush1.msra.mxu0 %v489
        %2017 = vmatprep.subr.mxu0 %v494
        %2018 = vmatpush1.msra.mxu0 %v493
        %2019 = vmatprep.subr.mxu0 %v498
        %2020 = vmatpush1.msra.mxu0 %v497
        %2021 = vmatprep.subr.mxu0 %v502
        %2022 = vmatpush1.msra.mxu0 %v501
        %2023 = vmatprep.subr.mxu0 %v506
        %2024 = vmatpush1.msra.mxu0 %v505
        %2025 = vmatprep.subr.mxu0 %v510
        %2026 = vmatpush1.msra.mxu0 %v509
        %2027 = vmatprep.subr.mxu0 %v514
        %2028 = vmatpush1.msra.mxu0 %v513
        %2029 = vmatprep.subr.mxu0 %v518
        %2030 = vmatpush1.msra.mxu0 %v517
        %2031 = vmatprep.subr.mxu0 %v522
        %2032 = vmatpush1.msra.mxu0 %v521
        %2033 = vmatprep.subr.mxu0 %v526
        %2034 = vmatpush1.msra.mxu0 %v525
        %2035 = vmatprep.subr.mxu0 %v530
        %2036 = vmatpush1.msra.mxu0 %v529
        %2037 = vmatprep.subr.mxu0 %v534
        %2038 = vmatpush1.msra.mxu0 %v533
        %2039 = vmatprep.subr.mxu0 %v538
        %2040 = vmatpush1.msra.mxu0 %v537
        %2041 = vmatprep.subr.mxu0 %v542
        %2042 = vmatpush1.msra.mxu0 %v541
        %2043 = vmatprep.subr.mxu0 %v546
        %2044 = vmatpush1.msra.mxu0 %v545
        %2045 = vmatprep.subr.mxu0 %v550
        %2046 = vmatpush1.msra.mxu0 %v549
        %2047 = vmatprep.subr.mxu0 %v554
        %2048 = vmatpush1.msra.mxu0 %v553
        %2049 = vmatprep.subr.mxu0 %v558
        %2050 = vmatpush1.msra.mxu0 %v557
        %2051 = vmatprep.subr.mxu0 %v562
        %2052 = vmatpush1.msra.mxu0 %v561
        %2053 = vmatprep.subr.mxu0 %v566
        %2054 = vmatpush1.msra.mxu0 %v565
        %2055 = vmatprep.subr.mxu0 %v570
        %2056 = vmatpush1.msra.mxu0 %v569
        %2057 = vmatprep.subr.mxu0 %v574
        %2058 = vmatpush1.msra.mxu0 %v573
        %2059 = vmatprep.subr.mxu0 %v578
        %2060 = vmatpush1.msra.mxu0 %v577
        %2061 = vmatprep.subr.mxu0 %v582
        %2062 = vmatpush1.msra.mxu0 %v581
        %2063 = vmatprep.subr.mxu0 %v586
        %2064 = vmatpush1.msra.mxu0 %v585
        %2065 = vmatprep.subr.mxu0 %v590
        %2066 = vmatpush1.msra.mxu0 %v589
        %2067 = vmatprep.subr.mxu0 %v594
        %2068 = vmatpush1.msra.mxu0 %v593
        %2069 = vmatprep.mubr.f32.mxu0 %v184
        %2070 = vmatmul.mubr.f32.gmra.mrb[0].mxu0 %v183
        %v2071 = vpop.f32.mrb[0].mxu0
        %v2072 = vadd.f32 %v1995, %v2071
        %v2073 = vpop.f32.mrb[0].mxu0
        %v2074 = vadd.f32 %v1997, %v2073
        %2075 = vmatprep.mubr.f32.mxu0 %v200
        %2076 = vmatmul.mubr.f32.gmra.mrb[0].mxu0 %v199
        %v2077 = vpop.f32.mrb[0].mxu0
        %v2078 = vadd.f32 %v2001, %v2077
        %v2079 = vpop.f32.mrb[0].mxu0
        %v2080 = vadd.f32 %v2003, %v2079
        %2081 = vdwg.mxu0
        %2082 = vmatprep.subr.mxu0 %v598
        %2083 = vmatpush1.msra.mxu0 %v597
        %2084 = vmatprep.subr.mxu0 %v602
        %2085 = vmatpush1.msra.mxu0 %v601
        %2086 = vmatprep.subr.mxu0 %v606
        %2087 = vmatpush1.msra.mxu0 %v605
        %2088 = vmatprep.subr.mxu0 %v610
        %2089 = vmatpush1.msra.mxu0 %v609
        %2090 = vmatprep.subr.mxu0 %v614
        %2091 = vmatpush1.msra.mxu0 %v613
        %2092 = vmatprep.subr.mxu0 %v618
        %2093 = vmatpush1.msra.mxu0 %v617
        %2094 = vmatprep.subr.mxu0 %v622
        %2095 = vmatpush1.msra.mxu0 %v621
        %2096 = vmatprep.subr.mxu0 %v626
        %2097 = vmatpush1.msra.mxu0 %v625
        %2098 = vmatprep.subr.mxu0 %v630
        %2099 = vmatpush1.msra.mxu0 %v629
        %2100 = vmatprep.subr.mxu0 %v634
        %2101 = vmatpush1.msra.mxu0 %v633
        %2102 = vmatprep.subr.mxu0 %v638
        %2103 = vmatpush1.msra.mxu0 %v637
        %2104 = vmatprep.subr.mxu0 %v642
        %2105 = vmatpush1.msra.mxu0 %v641
        %2106 = vmatprep.subr.mxu0 %v646
        %2107 = vmatpush1.msra.mxu0 %v645
        %2108 = vmatprep.subr.mxu0 %v650
        %2109 = vmatpush1.msra.mxu0 %v649
        %2110 = vmatprep.subr.mxu0 %v654
        %2111 = vmatpush1.msra.mxu0 %v653
        %2112 = vmatprep.subr.mxu0 %v658
        %2113 = vmatpush1.msra.mxu0 %v657
        %2114 = vmatprep.subr.mxu0 %v662
        %2115 = vmatpush1.msra.mxu0 %v661
        %2116 = vmatprep.subr.mxu0 %v666
        %2117 = vmatpush1.msra.mxu0 %v665
        %2118 = vmatprep.subr.mxu0 %v670
        %2119 = vmatpush1.msra.mxu0 %v669
        %2120 = vmatprep.subr.mxu0 %v674
        %2121 = vmatpush1.msra.mxu0 %v673
        %2122 = vmatprep.subr.mxu0 %v678
        %2123 = vmatpush1.msra.mxu0 %v677
        %2124 = vmatprep.subr.mxu0 %v682
        %2125 = vmatpush1.msra.mxu0 %v681
        %2126 = vmatprep.subr.mxu0 %v686
        %2127 = vmatpush1.msra.mxu0 %v685
        %2128 = vmatprep.subr.mxu0 %v690
        %2129 = vmatpush1.msra.mxu0 %v689
        %2130 = vmatprep.subr.mxu0 %v694
        %2131 = vmatpush1.msra.mxu0 %v693
        %2132 = vmatprep.subr.mxu0 %v698
        %2133 = vmatpush1.msra.mxu0 %v697
        %2134 = vmatprep.subr.mxu0 %v702
        %2135 = vmatpush1.msra.mxu0 %v701
        %2136 = vmatprep.subr.mxu0 %v706
        %2137 = vmatpush1.msra.mxu0 %v705
        %2138 = vmatprep.subr.mxu0 %v710
        %2139 = vmatpush1.msra.mxu0 %v709
        %2140 = vmatprep.subr.mxu0 %v714
        %2141 = vmatpush1.msra.mxu0 %v713
        %2142 = vmatprep.subr.mxu0 %v718
        %2143 = vmatpush1.msra.mxu0 %v717
        %2144 = vmatprep.subr.mxu0 %v722
        %2145 = vmatpush1.msra.mxu0 %v721
        %2146 = vmatprep.mubr.f32.mxu0 %v186
        %2147 = vmatmul.mubr.f32.gmra.mrb[0].mxu0 %v185
        %v2148 = vpop.f32.mrb[0].mxu0
        %v2149 = vadd.f32 %v2072, %v2148
        %v2150 = vpop.f32.mrb[0].mxu0
        %v2151 = vadd.f32 %v2074, %v2150
        %2152 = vmatprep.mubr.f32.mxu0 %v202
        %2153 = vmatmul.mubr.f32.gmra.mrb[0].mxu0 %v201
        %v2154 = vpop.f32.mrb[0].mxu0
        %v2155 = vadd.f32 %v2078, %v2154
        %v2156 = vpop.f32.mrb[0].mxu0
        %v2157 = vadd.f32 %v2080, %v2156
        %2158 = vdwg.mxu0
        %2159 = vmatprep.subr.mxu0 %v726
        %2160 = vmatpush1.msra.mxu0 %v725
        %2161 = vmatprep.subr.mxu0 %v730
        %2162 = vmatpush1.msra.mxu0 %v729
        %2163 = vmatprep.subr.mxu0 %v734
        %2164 = vmatpush1.msra.mxu0 %v733
        %2165 = vmatprep.subr.mxu0 %v738
        %2166 = vmatpush1.msra.mxu0 %v737
        %2167 = vmatprep.subr.mxu0 %v742
        %2168 = vmatpush1.msra.mxu0 %v741
        %2169 = vmatprep.subr.mxu0 %v746
        %2170 = vmatpush1.msra.mxu0 %v745
        %2171 = vmatprep.subr.mxu0 %v750
        %2172 = vmatpush1.msra.mxu0 %v749
        %2173 = vmatprep.subr.mxu0 %v754
        %2174 = vmatpush1.msra.mxu0 %v753
        %2175 = vmatprep.subr.mxu0 %v758
        %2176 = vmatpush1.msra.mxu0 %v757
        %2177 = vmatprep.subr.mxu0 %v762
        %2178 = vmatpush1.msra.mxu0 %v761
        %2179 = vmatprep.subr.mxu0 %v766
        %2180 = vmatpush1.msra.mxu0 %v765
        %2181 = vmatprep.subr.mxu0 %v770
        %2182 = vmatpush1.msra.mxu0 %v769
        %2183 = vmatprep.subr.mxu0 %v774
        %2184 = vmatpush1.msra.mxu0 %v773
        %2185 = vmatprep.subr.mxu0 %v778
        %2186 = vmatpush1.msra.mxu0 %v777
        %2187 = vmatprep.subr.mxu0 %v782
        %2188 = vmatpush1.msra.mxu0 %v781
        %2189 = vmatprep.subr.mxu0 %v786
        %2190 = vmatpush1.msra.mxu0 %v785
        %2191 = vmatprep.subr.mxu0 %v790
        %2192 = vmatpush1.msra.mxu0 %v789
        %2193 = vmatprep.subr.mxu0 %v794
        %2194 = vmatpush1.msra.mxu0 %v793
        %2195 = vmatprep.subr.mxu0 %v798
        %2196 = vmatpush1.msra.mxu0 %v797
        %2197 = vmatprep.subr.mxu0 %v802
        %2198 = vmatpush1.msra.mxu0 %v801
        %2199 = vmatprep.subr.mxu0 %v806
        %2200 = vmatpush1.msra.mxu0 %v805
        %2201 = vmatprep.subr.mxu0 %v810
        %2202 = vmatpush1.msra.mxu0 %v809
        %2203 = vmatprep.subr.mxu0 %v814
        %2204 = vmatpush1.msra.mxu0 %v813
        %2205 = vmatprep.subr.mxu0 %v818
        %2206 = vmatpush1.msra.mxu0 %v817
        %2207 = vmatprep.subr.mxu0 %v822
        %2208 = vmatpush1.msra.mxu0 %v821
        %2209 = vmatprep.subr.mxu0 %v826
        %2210 = vmatpush1.msra.mxu0 %v825
        %2211 = vmatprep.subr.mxu0 %v830
        %2212 = vmatpush1.msra.mxu0 %v829
        %2213 = vmatprep.subr.mxu0 %v834
        %2214 = vmatpush1.msra.mxu0 %v833
        %2215 = vmatprep.subr.mxu0 %v838
        %2216 = vmatpush1.msra.mxu0 %v837
        %2217 = vmatprep.subr.mxu0 %v842
        %2218 = vmatpush1.msra.mxu0 %v841
        %2219 = vmatprep.subr.mxu0 %v846
        %2220 = vmatpush1.msra.mxu0 %v845
        %2221 = vmatprep.subr.mxu0 %v850
        %2222 = vmatpush1.msra.mxu0 %v849
        %2223 = vmatprep.mubr.f32.mxu0 %v188
        %2224 = vmatmul.mubr.f32.gmra.mrb[0].mxu0 %v187
        %v2225 = vpop.f32.mrb[0].mxu0
        %v2226 = vadd.f32 %v2149, %v2225
        %v2227 = vpop.f32.mrb[0].mxu0
        %v2228 = vadd.f32 %v2151, %v2227
        %2229 = vmatprep.mubr.f32.mxu0 %v204
        %2230 = vmatmul.mubr.f32.gmra.mrb[0].mxu0 %v203
        %v2231 = vpop.f32.mrb[0].mxu0
        %v2232 = vadd.f32 %v2155, %v2231
        %v2233 = vpop.f32.mrb[0].mxu0
        %v2234 = vadd.f32 %v2157, %v2233
        %2235 = vdwg.mxu0
        %2236 = vmatprep.subr.mxu0 %v854
        %2237 = vmatpush1.msra.mxu0 %v853
        %2238 = vmatprep.subr.mxu0 %v858
        %2239 = vmatpush1.msra.mxu0 %v857
        %2240 = vmatprep.subr.mxu0 %v862
        %2241 = vmatpush1.msra.mxu0 %v861
        %2242 = vmatprep.subr.mxu0 %v866
        %2243 = vmatpush1.msra.mxu0 %v865
        %2244 = vmatprep.subr.mxu0 %v870
        %2245 = vmatpush1.msra.mxu0 %v869
        %2246 = vmatprep.subr.mxu0 %v874
        %2247 = vmatpush1.msra.mxu0 %v873
        %2248 = vmatprep.subr.mxu0 %v878
        %2249 = vmatpush1.msra.mxu0 %v877
        %2250 = vmatprep.subr.mxu0 %v882
        %2251 = vmatpush1.msra.mxu0 %v881
        %2252 = vmatprep.subr.mxu0 %v886
        %2253 = vmatpush1.msra.mxu0 %v885
        %2254 = vmatprep.subr.mxu0 %v890
        %2255 = vmatpush1.msra.mxu0 %v889
        %2256 = vmatprep.subr.mxu0 %v894
        %2257 = vmatpush1.msra.mxu0 %v893
        %2258 = vmatprep.subr.mxu0 %v898
        %2259 = vmatpush1.msra.mxu0 %v897
        %2260 = vmatprep.subr.mxu0 %v902
        %2261 = vmatpush1.msra.mxu0 %v901
        %2262 = vmatprep.subr.mxu0 %v906
        %2263 = vmatpush1.msra.mxu0 %v905
        %2264 = vmatprep.subr.mxu0 %v910
        %2265 = vmatpush1.msra.mxu0 %v909
        %2266 = vmatprep.subr.mxu0 %v914
        %2267 = vmatpush1.msra.mxu0 %v913
        %2268 = vmatprep.subr.mxu0 %v918
        %2269 = vmatpush1.msra.mxu0 %v917
        %2270 = vmatprep.subr.mxu0 %v922
        %2271 = vmatpush1.msra.mxu0 %v921
        %2272 = vmatprep.subr.mxu0 %v926
        %2273 = vmatpush1.msra.mxu0 %v925
        %2274 = vmatprep.subr.mxu0 %v930
        %2275 = vmatpush1.msra.mxu0 %v929
        %2276 = vmatprep.subr.mxu0 %v934
        %2277 = vmatpush1.msra.mxu0 %v933
        %2278 = vmatprep.subr.mxu0 %v938
        %2279 = vmatpush1.msra.mxu0 %v937
        %2280 = vmatprep.subr.mxu0 %v942
        %2281 = vmatpush1.msra.mxu0 %v941
        %2282 = vmatprep.subr.mxu0 %v946
        %2283 = vmatpush1.msra.mxu0 %v945
        %2284 = vmatprep.subr.mxu0 %v950
        %2285 = vmatpush1.msra.mxu0 %v949
        %2286 = vmatprep.subr.mxu0 %v954
        %2287 = vmatpush1.msra.mxu0 %v953
        %2288 = vmatprep.subr.mxu0 %v958
        %2289 = vmatpush1.msra.mxu0 %v957
        %2290 = vmatprep.subr.mxu0 %v962
        %2291 = vmatpush1.msra.mxu0 %v961
        %2292 = vmatprep.subr.mxu0 %v966
        %2293 = vmatpush1.msra.mxu0 %v965
        %2294 = vmatprep.subr.mxu0 %v970
        %2295 = vmatpush1.msra.mxu0 %v969
        %2296 = vmatprep.subr.mxu0 %v974
        %2297 = vmatpush1.msra.mxu0 %v973
        %2298 = vmatprep.subr.mxu0 %v978
        %2299 = vmatpush1.msra.mxu0 %v977
        %2300 = vmatprep.mubr.f32.mxu0 %v190
        %2301 = vmatmul.mubr.f32.gmra.mrb[0].mxu0 %v189
        %v2302 = vpop.f32.mrb[0].mxu0
        %v2303 = vadd.f32 %v2226, %v2302
        %v2304 = vpop.f32.mrb[0].mxu0
        %v2305 = vadd.f32 %v2228, %v2304
        %2306 = vmatprep.mubr.f32.mxu0 %v206
        %2307 = vmatmul.mubr.f32.gmra.mrb[0].mxu0 %v205
        %v2308 = vpop.f32.mrb[0].mxu0
        %v2309 = vadd.f32 %v2232, %v2308
        %v2310 = vpop.f32.mrb[0].mxu0
        %v2311 = vadd.f32 %v2234, %v2310
        %2312 = vdwg.mxu0
        %2313 = vmatprep.subr.mxu0 %v982
        %2314 = vmatpush1.msra.mxu0 %v981
        %2315 = vmatprep.subr.mxu0 %v986
        %2316 = vmatpush1.msra.mxu0 %v985
        %2317 = vmatprep.subr.mxu0 %v990
        %2318 = vmatpush1.msra.mxu0 %v989
        %2319 = vmatprep.subr.mxu0 %v994
        %2320 = vmatpush1.msra.mxu0 %v993
        %2321 = vmatprep.subr.mxu0 %v998
        %2322 = vmatpush1.msra.mxu0 %v997
        %2323 = vmatprep.subr.mxu0 %v1002
        %2324 = vmatpush1.msra.mxu0 %v1001
        %2325 = vmatprep.subr.mxu0 %v1006
        %2326 = vmatpush1.msra.mxu0 %v1005
        %2327 = vmatprep.subr.mxu0 %v1010
        %2328 = vmatpush1.msra.mxu0 %v1009
        %2329 = vmatprep.subr.mxu0 %v1014
        %2330 = vmatpush1.msra.mxu0 %v1013
        %2331 = vmatprep.subr.mxu0 %v1018
        %2332 = vmatpush1.msra.mxu0 %v1017
        %2333 = vmatprep.subr.mxu0 %v1022
        %2334 = vmatpush1.msra.mxu0 %v1021
        %2335 = vmatprep.subr.mxu0 %v1026
        %2336 = vmatpush1.msra.mxu0 %v1025
        %2337 = vmatprep.subr.mxu0 %v1030
        %2338 = vmatpush1.msra.mxu0 %v1029
        %2339 = vmatprep.subr.mxu0 %v1034
        %2340 = vmatpush1.msra.mxu0 %v1033
        %2341 = vmatprep.subr.mxu0 %v1038
        %2342 = vmatpush1.msra.mxu0 %v1037
        %2343 = vmatprep.subr.mxu0 %v1042
        %2344 = vmatpush1.msra.mxu0 %v1041
        %2345 = vmatprep.subr.mxu0 %v1046
        %2346 = vmatpush1.msra.mxu0 %v1045
        %2347 = vmatprep.subr.mxu0 %v1050
        %2348 = vmatpush1.msra.mxu0 %v1049
        %2349 = vmatprep.subr.mxu0 %v1054
        %2350 = vmatpush1.msra.mxu0 %v1053
        %2351 = vmatprep.subr.mxu0 %v1058
        %2352 = vmatpush1.msra.mxu0 %v1057
        %2353 = vmatprep.subr.mxu0 %v1062
        %2354 = vmatpush1.msra.mxu0 %v1061
        %2355 = vmatprep.subr.mxu0 %v1066
        %2356 = vmatpush1.msra.mxu0 %v1065
        %2357 = vmatprep.subr.mxu0 %v1070
        %2358 = vmatpush1.msra.mxu0 %v1069
        %2359 = vmatprep.subr.mxu0 %v1074
        %2360 = vmatpush1.msra.mxu0 %v1073
        %2361 = vmatprep.subr.mxu0 %v1078
        %2362 = vmatpush1.msra.mxu0 %v1077
        %2363 = vmatprep.subr.mxu0 %v1082
        %2364 = vmatpush1.msra.mxu0 %v1081
        %2365 = vmatprep.subr.mxu0 %v1086
        %2366 = vmatpush1.msra.mxu0 %v1085
        %2367 = vmatprep.subr.mxu0 %v1090
        %2368 = vmatpush1.msra.mxu0 %v1089
        %2369 = vmatprep.subr.mxu0 %v1094
        %2370 = vmatpush1.msra.mxu0 %v1093
        %2371 = vmatprep.subr.mxu0 %v1098
        %2372 = vmatpush1.msra.mxu0 %v1097
        %2373 = vmatprep.subr.mxu0 %v1102
        %2374 = vmatpush1.msra.mxu0 %v1101
        %2375 = vmatprep.subr.mxu0 %v1106
        %2376 = vmatpush1.msra.mxu0 %v1105
        %2377 = vmatprep.mubr.f32.mxu0 %v192
        %2378 = vmatmul.mubr.f32.gmra.mrb[0].mxu0 %v191
        %v2379 = vpop.f32.mrb[0].mxu0
        %v2380 = vadd.f32 %v2303, %v2379
        %v2381 = vpop.f32.mrb[0].mxu0
        %v2382 = vadd.f32 %v2305, %v2381
        %2383 = vmatprep.mubr.f32.mxu0 %v208
        %2384 = vmatmul.mubr.f32.gmra.mrb[0].mxu0 %v207
        %v2385 = vpop.f32.mrb[0].mxu0
        %v2386 = vadd.f32 %v2309, %v2385
        %v2387 = vpop.f32.mrb[0].mxu0
        %v2388 = vadd.f32 %v2311, %v2387
        %2389 = vdwg.mxu0
        %2390 = vmatprep.subr.mxu0 %v1110
        %2391 = vmatpush1.msra.mxu0 %v1109
        %2392 = vmatprep.subr.mxu0 %v1114
        %2393 = vmatpush1.msra.mxu0 %v1113
        %2394 = vmatprep.subr.mxu0 %v1118
        %2395 = vmatpush1.msra.mxu0 %v1117
        %2396 = vmatprep.subr.mxu0 %v1122
        %2397 = vmatpush1.msra.mxu0 %v1121
        %2398 = vmatprep.subr.mxu0 %v1126
        %2399 = vmatpush1.msra.mxu0 %v1125
        %2400 = vmatprep.subr.mxu0 %v1130
        %2401 = vmatpush1.msra.mxu0 %v1129
        %2402 = vmatprep.subr.mxu0 %v1134
        %2403 = vmatpush1.msra.mxu0 %v1133
        %2404 = vmatprep.subr.mxu0 %v1138
        %2405 = vmatpush1.msra.mxu0 %v1137
        %2406 = vmatprep.subr.mxu0 %v1142
        %2407 = vmatpush1.msra.mxu0 %v1141
        %2408 = vmatprep.subr.mxu0 %v1146
        %2409 = vmatpush1.msra.mxu0 %v1145
        %2410 = vmatprep.subr.mxu0 %v1150
        %2411 = vmatpush1.msra.mxu0 %v1149
        %2412 = vmatprep.subr.mxu0 %v1154
        %2413 = vmatpush1.msra.mxu0 %v1153
        %2414 = vmatprep.subr.mxu0 %v1158
        %2415 = vmatpush1.msra.mxu0 %v1157
        %2416 = vmatprep.subr.mxu0 %v1162
        %2417 = vmatpush1.msra.mxu0 %v1161
        %2418 = vmatprep.subr.mxu0 %v1166
        %2419 = vmatpush1.msra.mxu0 %v1165
        %2420 = vmatprep.subr.mxu0 %v1170
        %2421 = vmatpush1.msra.mxu0 %v1169
        %2422 = vmatprep.subr.mxu0 %v1174
        %2423 = vmatpush1.msra.mxu0 %v1173
        %2424 = vmatprep.subr.mxu0 %v1178
        %2425 = vmatpush1.msra.mxu0 %v1177
        %2426 = vmatprep.subr.mxu0 %v1182
        %2427 = vmatpush1.msra.mxu0 %v1181
        %2428 = vmatprep.subr.mxu0 %v1186
        %2429 = vmatpush1.msra.mxu0 %v1185
        %2430 = vmatprep.subr.mxu0 %v1190
        %2431 = vmatpush1.msra.mxu0 %v1189
        %2432 = vmatprep.subr.mxu0 %v1194
        %2433 = vmatpush1.msra.mxu0 %v1193
        %2434 = vmatprep.subr.mxu0 %v1198
        %2435 = vmatpush1.msra.mxu0 %v1197
        %2436 = vmatprep.subr.mxu0 %v1202
        %2437 = vmatpush1.msra.mxu0 %v1201
        %2438 = vmatprep.subr.mxu0 %v1206
        %2439 = vmatpush1.msra.mxu0 %v1205
        %2440 = vmatprep.subr.mxu0 %v1210
        %2441 = vmatpush1.msra.mxu0 %v1209
        %2442 = vmatprep.subr.mxu0 %v1214
        %2443 = vmatpush1.msra.mxu0 %v1213
        %2444 = vmatprep.subr.mxu0 %v1218
        %2445 = vmatpush1.msra.mxu0 %v1217
        %2446 = vmatprep.subr.mxu0 %v1222
        %2447 = vmatpush1.msra.mxu0 %v1221
        %2448 = vmatprep.subr.mxu0 %v1226
        %2449 = vmatpush1.msra.mxu0 %v1225
        %2450 = vmatprep.subr.mxu0 %v1230
        %2451 = vmatpush1.msra.mxu0 %v1229
        %2452 = vmatprep.subr.mxu0 %v1234
        %2453 = vmatpush1.msra.mxu0 %v1233
        %2454 = vmatprep.mubr.f32.mxu0 %v194
        %2455 = vmatmul.mubr.f32.gmra.mrb[0].mxu0 %v193
        %v2456 = vpop.f32.mrb[0].mxu0
        %v2457 = vadd.f32 %v2380, %v2456
        %v2458 = vpop.f32.mrb[0].mxu0
        %v2459 = vadd.f32 %v2382, %v2458
        %2460 = vmatprep.mubr.f32.mxu0 %v210
        %2461 = vmatmul.mubr.f32.gmra.mrb[0].mxu0 %v209
        %v2462 = vpop.f32.mrb[0].mxu0
        %v2463 = vadd.f32 %v2386, %v2462
        %v2464 = vpop.f32.mrb[0].mxu0
        %v2465 = vadd.f32 %v2388, %v2464
        %2466 = vdwg.mxu0
        %2467 = vst [vmem:[%s176] sm:$0xff] %v1841
        %2468 = vst [vmem:[%s176 + $0x8] sm:$0xff] %v1843
        %2469 = vst [vmem:[%s176 + $0x10] sm:$0xff] %v2457
        %2470 = vst [vmem:[%s176 + $0x18] sm:$0xff] %v2459
        %2471 = vst [vmem:[%s176 + $0x20] sm:$0xff] %v1847
        %2472 = vst [vmem:[%s176 + $0x28] sm:$0xff] %v1849
        %2473 = vst [vmem:[%s176 + $0x30] sm:$0xff] %v2463
        %2474 = vst [vmem:[%s176 + $0x38] sm:$0xff] %v2465
        %s2475 = sand.u32 %s75, 1
        %s2476 = scalar_lea.sflag [#allocation4], %s2475
        %s2477 = sand.u32 %s75, 1
        %s2478 = smul.addr %s2477, 64
        %s2479 = scalar_lea.vmem [#allocation7], %s2478
        // Predicated region
        $region37: #{tpu_custom_call.1} parent=27 // pred_check
          %p2480 = pneg %p85
        $region38: #{tpu_custom_call.1} parent=27 // pred_check_branch
          %2482 = sbr.rel (%p2480) target = $region40
        $region39: #{tpu_custom_call.1} parent=27 // pred_region
          %s2483 = smul.u32 4, %s20
          %s2485 = ssub.s32 1024, 1024
          %2486 = vsyncadd %s2476, %s2485
          %s2487 = smul.addr %s2483, 128
          %s2488 = scalar_lea.hbm %s2, %s2487
          %s2489 = sshll.u32 %s2479, 4
          %s2490 = int_to_ptr.vmem [resolvable:$true] %s2489
          %2495 = dma.vmem_to_hbm [thread:$0]  %s2490, 1024, %s2488, %s2476, 512, 4096, 32
        $region40: #{tpu_custom_call.1} parent=27 // pred_fallthru
          _
      $region28: #{tpu_custom_call.1} parent=5 // pred_fallthru
        _
      %p2496 = scmp.le.s32.totalorder 2, %s15
      // Predicated region
      $region41: #{tpu_custom_call.1} parent=5 // pred_check
        %p2497 = pneg %p2496
      $region42: #{tpu_custom_call.1} parent=5 // pred_check_branch
        %2499 = sbr.rel (%p2497) target = $region44
      $region43: #{tpu_custom_call.1} parent=5 // pred_region
        %s2500 = ssub.s32 %s15, 2
        // Predicated region
        $region45: #{tpu_custom_call.1} parent=43 // pred_check
          %p2501 = pneg %p91
        $region46: #{tpu_custom_call.1} parent=43 // pred_check_branch
          %2503 = sbr.rel (%p2501) target = $region48
        $region47: #{tpu_custom_call.1} parent=43 // pred_region
          %s2504 = sand.u32 %s76, 1
          %s2505 = scalar_lea.sflag [#allocation4], %s2504
          %s2506 = sand.u32 %s76, 1
          %s2507 = smul.addr %s2506, 64
          %s2508 = scalar_lea.vmem [#allocation7], %s2507
          %2509 = dma.done %s2505, 1024
        $region48: #{tpu_custom_call.1} parent=43 // pred_fallthru
          _
      $region44: #{tpu_custom_call.1} parent=5 // pred_fallthru
        _
    $region6: #{tpu_custom_call.1} parent=1 // loop_footer
      %s19 = sadd.s32 1, %s15
    $region7: #{tpu_custom_call.1} parent=1 // loop_footer_branch
      %14 = sbr.rel target = $region3
    $region8: #{tpu_custom_call.1} parent=1 // loop_exit
      _
    %2510 = vsyncpa [#allocation3], 1
    %s2511 = scalar_lea.sflag [#allocation3], 1
    %2512 = vsyncpa %s2511, 1
    %2513 = vsyncpa [#allocation6], 1
    %s2514 = scalar_lea.sflag [#allocation6], 1
    %2515 = vsyncpa %s2514, 1
    %2516 = vsyncpa [#allocation4], 1
    %s2517 = scalar_lea.sflag [#allocation4], 1
    %2518 = vsyncpa %s2517, 1

</llo_original>
